<compile_context>
chip_gen: v5e
topology: v5e:2x2
jax: 0.10.0
libtpu: 0.0.40
codegen_flags: <defaults>
</compile_context>

<pallas_src>
import functools

import jax
import jax.numpy as jnp
from jax import lax
from jax.experimental import pallas as pl
from jax.experimental.pallas import tpu as pltpu

_UNROLL = 8  # sublane-sized unroll of the serial recurrence


def _round_up(v: int, m: int) -> int:
    return (v + m - 1) // m * m


def _cdiv(a: int, b: int) -> int:
    return (a + b - 1) // b


def _vmem_capacity_bytes() -> int:
    """Physical VMEM per core; conservative fallback if the query fails."""
    try:
        return int(pltpu.get_tpu_info().vmem_capacity_bytes)
    except Exception:
        return 64 << 20  # v7x per-core VMEM (smallest of the supported parts)


def _reservoir_kernel(u_ref, w_ref, out_ref, charges_ref, flux_ref, *, c0, k, dt):
    """One grid step = one chunk of Tc timesteps of the serial recurrence.

    u_ref:     (Tc, Np)  precomputed input projection chunk (pipelined)
    w_ref:     (Np, Np)  padded adjacency (invariant: same block every step)
    out_ref:   (Tc, Np)  output chunk
    charges_ref, flux_ref: (1, Np) persistent state scratch (across grid steps)
    """

    # Initialize the recurrent state once, at the first chunk.
    @pl.when(pl.program_id(0) == 0)
    def _init():
        charges_ref[...] = jnp.zeros_like(charges_ref)
        flux_ref[...] = jnp.zeros_like(flux_ref)

    # Hoist the full W load out of the recurrence loop (Mosaic does not
    # reliably hoist ref loads across fori_loop iterations).
    # Follow-up perf lever: keep W weight-stationary in the MXU via
    # pltpu.matmul_push_rhs (once per chunk) + matmul_acc_lhs/matmul_pop per
    # step; requires generation-specific weight-register tiling + bundle check.
    w = w_ref[...]

    tc = out_ref.shape[0]
    n_blk = tc // _UNROLL  # Tc is a multiple of _UNROLL (enforced by wrapper)

    def body(blk, carry):
        charges, flux = carry  # each (1, Np) f32
        base = pl.multiple_of(blk * _UNROLL, _UNROLL)
        for s in range(_UNROLL):  # static unroll: LLO sees the whole chain
            v_raw = jnp.dot(charges, w,
                            preferred_element_type=jnp.float32,
                            precision=lax.Precision.HIGHEST)
            v_raw = v_raw + u_ref[pl.ds(base + s, 1), :]
            v_in = jnp.tanh(v_raw)
            flux = flux + v_in * dt
            charges = (c0 + k * flux) * v_in
            # Store each row as produced: store slots are idle in this
            # latency-bound loop, and this keeps only one row live (no spills
            # for large Np).
            out_ref[pl.ds(base + s, 1), :] = charges
        return charges, flux

    charges, flux = lax.fori_loop(
        0, n_blk, body, (charges_ref[...], flux_ref[...]))

    # Persist state for the next chunk.
    charges_ref[...] = charges
    flux_ref[...] = flux


def memcapacitive_reservoir_forward(x, W, Win, *, c0=1.0, k=0.5, dt=1e-3):
    """x: (1, T, D), W: (N, N), Win: (N, D)  ->  (1, T, N)."""
    assert x.shape[0] == 1, "batch_size=1 only (matches the PyTorch module)"
    _, T, D = x.shape
    N = W.shape[0]

    # Lane-dense padding of the node dimension.
    Np = _round_up(max(N, 128), 128)

    # Generation-aware chunking / VMEM budget.
    capacity = _vmem_capacity_bytes()
    budget = max(capacity - (8 << 20), 16 << 20)          # headroom under physical
    tc_cap = 1024 if capacity >= (100 << 20) else 256     # bigger chunks on 128 MiB parts

    def _chunk_bytes(tc):
        # 2x double-buffered W (invariant but still double-buffered by Pallas),
        # 2x u chunk, 2x out chunk, state scratch, + internal-scratch slack.
        return 4 * (2 * Np * Np + 4 * tc * Np + 2 * Np) + (2 << 20)

    while tc_cap > _UNROLL and _chunk_bytes(tc_cap) > budget:
        tc_cap //= 2
    tc_cap = max(tc_cap, _UNROLL)

    # Pick Tc to minimise Tp - T padding (padded steps still run the matvec).
    n_chunks = _cdiv(T, tc_cap)
    Tc = _round_up(_cdiv(T, n_chunks), _UNROLL)
    Tp = n_chunks * Tc

    vmem_need = _chunk_bytes(Tc)
    vmem_limit = int(min(max(vmem_need, 32 << 20), budget))

    # Whole-sequence input projection in the wrapper: one big MXU matmul, off
    # the serial critical path.  Padded nodes (cols >= N) and padded timesteps
    # (rows >= T) are exactly zero and stay zero through the recurrence.
    x2d = jnp.zeros((Tp, D), jnp.float32).at[:T].set(x[0].astype(jnp.float32))
    win_t_p = jnp.zeros((D, Np), jnp.float32).at[:, :N].set(Win.T.astype(jnp.float32))
    u = jnp.dot(x2d, win_t_p, precision=lax.Precision.HIGHEST)          # (Tp, Np)
    w_p = jnp.zeros((Np, Np), jnp.float32).at[:N, :N].set(W.astype(jnp.float32))

    kernel = functools.partial(_reservoir_kernel,
                               c0=float(c0), k=float(k), dt=float(dt))

    out = pl.pallas_call(
        kernel,
        out_shape=jax.ShapeDtypeStruct((Tp, Np), jnp.float32),
        grid_spec=pltpu.PrefetchScalarGridSpec(
            num_scalar_prefetch=0,
            grid=(Tp // Tc,),
            in_specs=[
                pl.BlockSpec((Tc, Np), lambda i: (i, 0)),   # u chunk (pipelined)
                pl.BlockSpec((Np, Np), lambda i: (0, 0)),   # W (invariant block)
            ],
            out_specs=pl.BlockSpec((Tc, Np), lambda i: (i, 0)),
            scratch_shapes=[
                pltpu.VMEM((1, Np), jnp.float32),   # charges (persists across grid)
                pltpu.VMEM((1, Np), jnp.float32),   # flux    (persists across grid)
            ],
        ),
        compiler_params=pltpu.CompilerParams(
            dimension_semantics=("arbitrary",),     # serial recurrence over T
            vmem_limit_bytes=vmem_limit,
        ),
    )(u, w_p)

    return out[None, :T, :N]  # (1, T, N)

# TODO(synk): the non-vectorized branch (ModuleList of arbitrary memc_factory
# neuron modules) has no Pallas equivalent; only the vectorized branch
# (Memcapacitor with c0/k/dt) is implemented, and batch>1 raises in the
# original module so it is not supported here either.


def _reference_forward(x, W, Win, *, c0=1.0, k=0.5, dt=1e-3):
    """Pure-JAX reference of the same recurrence (true-f32 matmuls)."""
    _, T, _ = x.shape
    N = W.shape[0]

    def step(carry, x_t):
        charges, flux = carry
        v_raw = (jnp.dot(charges, W, precision=lax.Precision.HIGHEST)
                 + jnp.dot(x_t, Win.T, precision=lax.Precision.HIGHEST))  # (1, N)
        v_in = jnp.tanh(v_raw)
        flux = flux + v_in[0] * dt
        charges = ((c0 + k * flux) * v_in[0])[None, :]
        return (charges, flux), charges[0]

    init = (jnp.zeros((1, N), jnp.float32), jnp.zeros((N,), jnp.float32))
    _, states = lax.scan(step, init, x[0][:, None, :])  # x_t: (1, D)
    return states[None, :, :]


if __name__ == "__main__":
    # Small deterministic shapes consistent with the module's forward:
    # batch=1, seq T=8, input_dim D=4, n_nodes N=32.
    B, T, D, N = 1, 8, 4, 32
    c0, k_param, dt = 1.0, 0.5, 1e-3
    input_scale = 1.0

    key = jax.random.PRNGKey(0)
    k_adj, k_win, k_x = jax.random.split(key, 3)

    adjacency = jax.random.uniform(k_adj, (N, N), jnp.float32, -0.5, 0.5)  # W: (N, N)
    Win = jax.random.normal(k_win, (N, D), jnp.float32) * input_scale       # Win: (N, D)
    x = jax.random.normal(k_x, (B, T, D), jnp.float32)                      # (1, T, D)

    out = memcapacitive_reservoir_forward(x, adjacency, Win, c0=c0, k=k_param, dt=dt)
    out = jax.block_until_ready(out)

    ref = _reference_forward(x, adjacency, Win, c0=c0, k=k_param, dt=dt)
    assert out.shape == (B, T, N), out.shape
    assert jnp.allclose(out, ref, rtol=1e-3, atol=1e-4), "mismatch vs JAX reference"

    print("KERNEL_OK")
</pallas_src>

<mosaic_0001>
module attributes {stable_mosaic.version = 11 : i64} {
  func.func @_reservoir_kernel(%arg0: i32, %arg1: memref<8x128xf32, #tpu.memory_space<vmem>>, %arg2: memref<128x128xf32, #tpu.memory_space<vmem>>, %arg3: memref<8x128xf32, #tpu.memory_space<vmem>>, %arg4: memref<1x128xf32, #tpu.memory_space<vmem>>, %arg5: memref<1x128xf32, #tpu.memory_space<vmem>>) attributes {dimension_semantics = [#tpu.dimension_semantics<arbitrary>], iteration_bounds = array<i64: 1>, scalar_prefetch = 0 : i64, scratch_operands = 2 : i64, tpu.core_type = #tpu.core_type<tc>, window_params = [{transform_indices = @transform_0, window_bounds = array<i64: 8, 128>}, {pipeline_mode = #tpu.pipeline_mode<synchronous>, transform_indices = @transform_1, window_bounds = array<i64: 128, 128>}, {transform_indices = @transform_2, window_bounds = array<i64: 8, 128>}]} {
    %c0_i32 = arith.constant 0 : i32
    %0 = arith.cmpi eq, %arg0, %c0_i32 : i32
    %1 = arith.extui %0 : i1 to i32
    %c0_i32_0 = arith.constant 0 : i32
    %2 = arith.cmpi ne, %1, %c0_i32_0 : i32
    scf.if %2 {
      %cst_68 = arith.constant 0.000000e+00 : f32
      %146 = vector.broadcast %cst_68 : f32 to vector<1x128xf32>
      %c0_69 = arith.constant 0 : index
      %c0_70 = arith.constant 0 : index
      %147 = vector.load %arg4[%c0_69, %c0_70] : memref<1x128xf32, #tpu.memory_space<vmem>>, vector<1x128xf32>
      tpu.vector_store %arg4[%c0_69, %c0_70], %146 {strides = array<i32>} : memref<1x128xf32, #tpu.memory_space<vmem>>, vector<1x128xf32>,
      %cst_71 = arith.constant 0.000000e+00 : f32
      %148 = vector.broadcast %cst_71 : f32 to vector<1x128xf32>
      %c0_72 = arith.constant 0 : index
      %c0_73 = arith.constant 0 : index
      %149 = vector.load %arg5[%c0_72, %c0_73] : memref<1x128xf32, #tpu.memory_space<vmem>>, vector<1x128xf32>
      tpu.vector_store %arg5[%c0_72, %c0_73], %148 {strides = array<i32>} : memref<1x128xf32, #tpu.memory_space<vmem>>, vector<1x128xf32>,
    } else {
    }
    %c0 = arith.constant 0 : index
    %c0_1 = arith.constant 0 : index
    %3 = vector.load %arg2[%c0, %c0_1] : memref<128x128xf32, #tpu.memory_space<vmem>>, vector<128x128xf32>
    %c0_2 = arith.constant 0 : index
    %c0_3 = arith.constant 0 : index
    %4 = vector.load %arg4[%c0_2, %c0_3] : memref<1x128xf32, #tpu.memory_space<vmem>>, vector<1x128xf32>
    %c0_4 = arith.constant 0 : index
    %c0_5 = arith.constant 0 : index
    %5 = vector.load %arg5[%c0_4, %c0_5] : memref<1x128xf32, #tpu.memory_space<vmem>>, vector<1x128xf32>
    %c0_i32_6 = arith.constant 0 : i32
    %c8_i32 = arith.constant 8 : i32
    %6 = arith.muli %c0_i32_6, %c8_i32 : i32
    %7 = tpu.assume_multiple %6, 8 : i32
    %cst = arith.constant dense<0.000000e+00> : vector<1x128xf32>
    %8 = tpu.matmul %4, %3, %cst {dimension_numbers = #tpu.dot_dimension_numbers<[1], [0], [0], [1], [0, 0, 1, 1], [], []>, precision = #tpu.contract_precision<fp32>} : vector<1x128xf32>, vector<128x128xf32>, vector<1x128xf32> -> vector<1x128xf32>
    %c0_i32_7 = arith.constant 0 : i32
    %9 = arith.addi %7, %c0_i32_7 : i32
    %10 = arith.index_cast %9 : i32 to index
    %c0_8 = arith.constant 0 : index
    %11 = vector.load %arg1[%10, %c0_8] : memref<8x128xf32, #tpu.memory_space<vmem>>, vector<1x128xf32>
    %12 = arith.addf %8, %11 : vector<1x128xf32>
    %13 = math.tanh %12 : vector<1x128xf32>
    %cst_9 = arith.constant 1.000000e-03 : f32
    %14 = vector.broadcast %cst_9 : f32 to vector<1x128xf32>
    %15 = arith.mulf %13, %14 : vector<1x128xf32>
    %16 = arith.addf %5, %15 : vector<1x128xf32>
    %cst_10 = arith.constant 5.000000e-01 : f32
    %17 = vector.broadcast %cst_10 : f32 to vector<1x128xf32>
    %18 = arith.mulf %17, %16 : vector<1x128xf32>
    %cst_11 = arith.constant 1.000000e+00 : f32
    %19 = vector.broadcast %cst_11 : f32 to vector<1x128xf32>
    %20 = arith.addf %19, %18 : vector<1x128xf32>
    %21 = arith.mulf %20, %13 : vector<1x128xf32>
    %c0_i32_12 = arith.constant 0 : i32
    %22 = arith.addi %7, %c0_i32_12 : i32
    %23 = arith.index_cast %22 : i32 to index
    %c0_13 = arith.constant 0 : index
    %24 = vector.load %arg3[%23, %c0_13] : memref<8x128xf32, #tpu.memory_space<vmem>>, vector<1x128xf32>
    tpu.vector_store %arg3[%23, %c0_13], %21 {strides = array<i32>} : memref<8x128xf32, #tpu.memory_space<vmem>>, vector<1x128xf32>,
    %cst_14 = arith.constant dense<0.000000e+00> : vector<1x128xf32>
    %25 = tpu.matmul %21, %3, %cst_14 {dimension_numbers = #tpu.dot_dimension_numbers<[1], [0], [0], [1], [0, 0, 1, 1], [], []>, precision = #tpu.contract_precision<fp32>} : vector<1x128xf32>, vector<128x128xf32>, vector<1x128xf32> -> vector<1x128xf32>
    %c1_i32 = arith.constant 1 : i32
    %26 = arith.addi %7, %c1_i32 : i32
    %27 = arith.index_cast %26 : i32 to index
    %c0_15 = arith.constant 0 : index
    %28 = vector.load %arg1[%27, %c0_15] : memref<8x128xf32, #tpu.memory_space<vmem>>, vector<1x128xf32>
    %29 = arith.addf %25, %28 : vector<1x128xf32>
    %30 = math.tanh %29 : vector<1x128xf32>
    %cst_16 = arith.constant 1.000000e-03 : f32
    %31 = vector.broadcast %cst_16 : f32 to vector<1x128xf32>
    %32 = arith.mulf %30, %31 : vector<1x128xf32>
    %33 = arith.addf %16, %32 : vector<1x128xf32>
    %cst_17 = arith.constant 5.000000e-01 : f32
    %34 = vector.broadcast %cst_17 : f32 to vector<1x128xf32>
    %35 = arith.mulf %34, %33 : vector<1x128xf32>
    %cst_18 = arith.constant 1.000000e+00 : f32
    %36 = vector.broadcast %cst_18 : f32 to vector<1x128xf32>
    %37 = arith.addf %36, %35 : vector<1x128xf32>
    %38 = arith.mulf %37, %30 : vector<1x128xf32>
    %c1_i32_19 = arith.constant 1 : i32
    %39 = arith.addi %7, %c1_i32_19 : i32
    %40 = arith.index_cast %39 : i32 to index
    %c0_20 = arith.constant 0 : index
    %41 = vector.load %arg3[%40, %c0_20] : memref<8x128xf32, #tpu.memory_space<vmem>>, vector<1x128xf32>
    tpu.vector_store %arg3[%40, %c0_20], %38 {strides = array<i32>} : memref<8x128xf32, #tpu.memory_space<vmem>>, vector<1x128xf32>,
    %cst_21 = arith.constant dense<0.000000e+00> : vector<1x128xf32>
    %42 = tpu.matmul %38, %3, %cst_21 {dimension_numbers = #tpu.dot_dimension_numbers<[1], [0], [0], [1], [0, 0, 1, 1], [], []>, precision = #tpu.contract_precision<fp32>} : vector<1x128xf32>, vector<128x128xf32>, vector<1x128xf32> -> vector<1x128xf32>
    %c2_i32 = arith.constant 2 : i32
    %43 = arith.addi %7, %c2_i32 : i32
    %44 = arith.index_cast %43 : i32 to index
    %c0_22 = arith.constant 0 : index
    %45 = vector.load %arg1[%44, %c0_22] : memref<8x128xf32, #tpu.memory_space<vmem>>, vector<1x128xf32>
    %46 = arith.addf %42, %45 : vector<1x128xf32>
    %47 = math.tanh %46 : vector<1x128xf32>
    %cst_23 = arith.constant 1.000000e-03 : f32
    %48 = vector.broadcast %cst_23 : f32 to vector<1x128xf32>
    %49 = arith.mulf %47, %48 : vector<1x128xf32>
    %50 = arith.addf %33, %49 : vector<1x128xf32>
    %cst_24 = arith.constant 5.000000e-01 : f32
    %51 = vector.broadcast %cst_24 : f32 to vector<1x128xf32>
    %52 = arith.mulf %51, %50 : vector<1x128xf32>
    %cst_25 = arith.constant 1.000000e+00 : f32
    %53 = vector.broadcast %cst_25 : f32 to vector<1x128xf32>
    %54 = arith.addf %53, %52 : vector<1x128xf32>
    %55 = arith.mulf %54, %47 : vector<1x128xf32>
    %c2_i32_26 = arith.constant 2 : i32
    %56 = arith.addi %7, %c2_i32_26 : i32
    %57 = arith.index_cast %56 : i32 to index
    %c0_27 = arith.constant 0 : index
    %58 = vector.load %arg3[%57, %c0_27] : memref<8x128xf32, #tpu.memory_space<vmem>>, vector<1x128xf32>
    tpu.vector_store %arg3[%57, %c0_27], %55 {strides = array<i32>} : memref<8x128xf32, #tpu.memory_space<vmem>>, vector<1x128xf32>,
    %cst_28 = arith.constant dense<0.000000e+00> : vector<1x128xf32>
    %59 = tpu.matmul %55, %3, %cst_28 {dimension_numbers = #tpu.dot_dimension_numbers<[1], [0], [0], [1], [0, 0, 1, 1], [], []>, precision = #tpu.contract_precision<fp32>} : vector<1x128xf32>, vector<128x128xf32>, vector<1x128xf32> -> vector<1x128xf32>
    %c3_i32 = arith.constant 3 : i32
    %60 = arith.addi %7, %c3_i32 : i32
    %61 = arith.index_cast %60 : i32 to index
    %c0_29 = arith.constant 0 : index
    %62 = vector.load %arg1[%61, %c0_29] : memref<8x128xf32, #tpu.memory_space<vmem>>, vector<1x128xf32>
    %63 = arith.addf %59, %62 : vector<1x128xf32>
    %64 = math.tanh %63 : vector<1x128xf32>
    %cst_30 = arith.constant 1.000000e-03 : f32
    %65 = vector.broadcast %cst_30 : f32 to vector<1x128xf32>
    %66 = arith.mulf %64, %65 : vector<1x128xf32>
    %67 = arith.addf %50, %66 : vector<1x128xf32>
    %cst_31 = arith.constant 5.000000e-01 : f32
    %68 = vector.broadcast %cst_31 : f32 to vector<1x128xf32>
    %69 = arith.mulf %68, %67 : vector<1x128xf32>
    %cst_32 = arith.constant 1.000000e+00 : f32
    %70 = vector.broadcast %cst_32 : f32 to vector<1x128xf32>
    %71 = arith.addf %70, %69 : vector<1x128xf32>
    %72 = arith.mulf %71, %64 : vector<1x128xf32>
    %c3_i32_33 = arith.constant 3 : i32
    %73 = arith.addi %7, %c3_i32_33 : i32
    %74 = arith.index_cast %73 : i32 to index
    %c0_34 = arith.constant 0 : index
    %75 = vector.load %arg3[%74, %c0_34] : memref<8x128xf32, #tpu.memory_space<vmem>>, vector<1x128xf32>
    tpu.vector_store %arg3[%74, %c0_34], %72 {strides = array<i32>} : memref<8x128xf32, #tpu.memory_space<vmem>>, vector<1x128xf32>,
    %cst_35 = arith.constant dense<0.000000e+00> : vector<1x128xf32>
    %76 = tpu.matmul %72, %3, %cst_35 {dimension_numbers = #tpu.dot_dimension_numbers<[1], [0], [0], [1], [0, 0, 1, 1], [], []>, precision = #tpu.contract_precision<fp32>} : vector<1x128xf32>, vector<128x128xf32>, vector<1x128xf32> -> vector<1x128xf32>
    %c4_i32 = arith.constant 4 : i32
    %77 = arith.addi %7, %c4_i32 : i32
    %78 = arith.index_cast %77 : i32 to index
    %c0_36 = arith.constant 0 : index
    %79 = vector.load %arg1[%78, %c0_36] : memref<8x128xf32, #tpu.memory_space<vmem>>, vector<1x128xf32>
    %80 = arith.addf %76, %79 : vector<1x128xf32>
    %81 = math.tanh %80 : vector<1x128xf32>
    %cst_37 = arith.constant 1.000000e-03 : f32
    %82 = vector.broadcast %cst_37 : f32 to vector<1x128xf32>
    %83 = arith.mulf %81, %82 : vector<1x128xf32>
    %84 = arith.addf %67, %83 : vector<1x128xf32>
    %cst_38 = arith.constant 5.000000e-01 : f32
    %85 = vector.broadcast %cst_38 : f32 to vector<1x128xf32>
    %86 = arith.mulf %85, %84 : vector<1x128xf32>
    %cst_39 = arith.constant 1.000000e+00 : f32
    %87 = vector.broadcast %cst_39 : f32 to vector<1x128xf32>
    %88 = arith.addf %87, %86 : vector<1x128xf32>
    %89 = arith.mulf %88, %81 : vector<1x128xf32>
    %c4_i32_40 = arith.constant 4 : i32
    %90 = arith.addi %7, %c4_i32_40 : i32
    %91 = arith.index_cast %90 : i32 to index
    %c0_41 = arith.constant 0 : index
    %92 = vector.load %arg3[%91, %c0_41] : memref<8x128xf32, #tpu.memory_space<vmem>>, vector<1x128xf32>
    tpu.vector_store %arg3[%91, %c0_41], %89 {strides = array<i32>} : memref<8x128xf32, #tpu.memory_space<vmem>>, vector<1x128xf32>,
    %cst_42 = arith.constant dense<0.000000e+00> : vector<1x128xf32>
    %93 = tpu.matmul %89, %3, %cst_42 {dimension_numbers = #tpu.dot_dimension_numbers<[1], [0], [0], [1], [0, 0, 1, 1], [], []>, precision = #tpu.contract_precision<fp32>} : vector<1x128xf32>, vector<128x128xf32>, vector<1x128xf32> -> vector<1x128xf32>
    %c5_i32 = arith.constant 5 : i32
    %94 = arith.addi %7, %c5_i32 : i32
    %95 = arith.index_cast %94 : i32 to index
    %c0_43 = arith.constant 0 : index
    %96 = vector.load %arg1[%95, %c0_43] : memref<8x128xf32, #tpu.memory_space<vmem>>, vector<1x128xf32>
    %97 = arith.addf %93, %96 : vector<1x128xf32>
    %98 = math.tanh %97 : vector<1x128xf32>
    %cst_44 = arith.constant 1.000000e-03 : f32
    %99 = vector.broadcast %cst_44 : f32 to vector<1x128xf32>
    %100 = arith.mulf %98, %99 : vector<1x128xf32>
    %101 = arith.addf %84, %100 : vector<1x128xf32>
    %cst_45 = arith.constant 5.000000e-01 : f32
    %102 = vector.broadcast %cst_45 : f32 to vector<1x128xf32>
    %103 = arith.mulf %102, %101 : vector<1x128xf32>
    %cst_46 = arith.constant 1.000000e+00 : f32
    %104 = vector.broadcast %cst_46 : f32 to vector<1x128xf32>
    %105 = arith.addf %104, %103 : vector<1x128xf32>
    %106 = arith.mulf %105, %98 : vector<1x128xf32>
    %c5_i32_47 = arith.constant 5 : i32
    %107 = arith.addi %7, %c5_i32_47 : i32
    %108 = arith.index_cast %107 : i32 to index
    %c0_48 = arith.constant 0 : index
    %109 = vector.load %arg3[%108, %c0_48] : memref<8x128xf32, #tpu.memory_space<vmem>>, vector<1x128xf32>
    tpu.vector_store %arg3[%108, %c0_48], %106 {strides = array<i32>} : memref<8x128xf32, #tpu.memory_space<vmem>>, vector<1x128xf32>,
    %cst_49 = arith.constant dense<0.000000e+00> : vector<1x128xf32>
    %110 = tpu.matmul %106, %3, %cst_49 {dimension_numbers = #tpu.dot_dimension_numbers<[1], [0], [0], [1], [0, 0, 1, 1], [], []>, precision = #tpu.contract_precision<fp32>} : vector<1x128xf32>, vector<128x128xf32>, vector<1x128xf32> -> vector<1x128xf32>
    %c6_i32 = arith.constant 6 : i32
    %111 = arith.addi %7, %c6_i32 : i32
    %112 = arith.index_cast %111 : i32 to index
    %c0_50 = arith.constant 0 : index
    %113 = vector.load %arg1[%112, %c0_50] : memref<8x128xf32, #tpu.memory_space<vmem>>, vector<1x128xf32>
    %114 = arith.addf %110, %113 : vector<1x128xf32>
    %115 = math.tanh %114 : vector<1x128xf32>
    %cst_51 = arith.constant 1.000000e-03 : f32
    %116 = vector.broadcast %cst_51 : f32 to vector<1x128xf32>
    %117 = arith.mulf %115, %116 : vector<1x128xf32>
    %118 = arith.addf %101, %117 : vector<1x128xf32>
    %cst_52 = arith.constant 5.000000e-01 : f32
    %119 = vector.broadcast %cst_52 : f32 to vector<1x128xf32>
    %120 = arith.mulf %119, %118 : vector<1x128xf32>
    %cst_53 = arith.constant 1.000000e+00 : f32
    %121 = vector.broadcast %cst_53 : f32 to vector<1x128xf32>
    %122 = arith.addf %121, %120 : vector<1x128xf32>
    %123 = arith.mulf %122, %115 : vector<1x128xf32>
    %c6_i32_54 = arith.constant 6 : i32
    %124 = arith.addi %7, %c6_i32_54 : i32
    %125 = arith.index_cast %124 : i32 to index
    %c0_55 = arith.constant 0 : index
    %126 = vector.load %arg3[%125, %c0_55] : memref<8x128xf32, #tpu.memory_space<vmem>>, vector<1x128xf32>
    tpu.vector_store %arg3[%125, %c0_55], %123 {strides = array<i32>} : memref<8x128xf32, #tpu.memory_space<vmem>>, vector<1x128xf32>,
    %cst_56 = arith.constant dense<0.000000e+00> : vector<1x128xf32>
    %127 = tpu.matmul %123, %3, %cst_56 {dimension_numbers = #tpu.dot_dimension_numbers<[1], [0], [0], [1], [0, 0, 1, 1], [], []>, precision = #tpu.contract_precision<fp32>} : vector<1x128xf32>, vector<128x128xf32>, vector<1x128xf32> -> vector<1x128xf32>
    %c7_i32 = arith.constant 7 : i32
    %128 = arith.addi %7, %c7_i32 : i32
    %129 = arith.index_cast %128 : i32 to index
    %c0_57 = arith.constant 0 : index
    %130 = vector.load %arg1[%129, %c0_57] : memref<8x128xf32, #tpu.memory_space<vmem>>, vector<1x128xf32>
    %131 = arith.addf %127, %130 : vector<1x128xf32>
    %132 = math.tanh %131 : vector<1x128xf32>
    %cst_58 = arith.constant 1.000000e-03 : f32
    %133 = vector.broadcast %cst_58 : f32 to vector<1x128xf32>
    %134 = arith.mulf %132, %133 : vector<1x128xf32>
    %135 = arith.addf %118, %134 : vector<1x128xf32>
    %cst_59 = arith.constant 5.000000e-01 : f32
    %136 = vector.broadcast %cst_59 : f32 to vector<1x128xf32>
    %137 = arith.mulf %136, %135 : vector<1x128xf32>
    %cst_60 = arith.constant 1.000000e+00 : f32
    %138 = vector.broadcast %cst_60 : f32 to vector<1x128xf32>
    %139 = arith.addf %138, %137 : vector<1x128xf32>
    %140 = arith.mulf %139, %132 : vector<1x128xf32>
    %c7_i32_61 = arith.constant 7 : i32
    %141 = arith.addi %7, %c7_i32_61 : i32
    %142 = arith.index_cast %141 : i32 to index
    %c0_62 = arith.constant 0 : index
    %143 = vector.load %arg3[%142, %c0_62] : memref<8x128xf32, #tpu.memory_space<vmem>>, vector<1x128xf32>
    tpu.vector_store %arg3[%142, %c0_62], %140 {strides = array<i32>} : memref<8x128xf32, #tpu.memory_space<vmem>>, vector<1x128xf32>,
    %c1_i32_63 = arith.constant 1 : i32
    %c0_64 = arith.constant 0 : index
    %c0_65 = arith.constant 0 : index
    %144 = vector.load %arg4[%c0_64, %c0_65] : memref<1x128xf32, #tpu.memory_space<vmem>>, vector<1x128xf32>
    tpu.vector_store %arg4[%c0_64, %c0_65], %140 {strides = array<i32>} : memref<1x128xf32, #tpu.memory_space<vmem>>, vector<1x128xf32>,
    %c0_66 = arith.constant 0 : index
    %c0_67 = arith.constant 0 : index
    %145 = vector.load %arg5[%c0_66, %c0_67] : memref<1x128xf32, #tpu.memory_space<vmem>>, vector<1x128xf32>
    tpu.vector_store %arg5[%c0_66, %c0_67], %135 {strides = array<i32>} : memref<1x128xf32, #tpu.memory_space<vmem>>, vector<1x128xf32>,
    return
  }
  func.func @transform_0(%arg0: i32) -> (i32, i32) {
    %c0_i32 = arith.constant 0 : i32
    %c0_i32_0 = arith.constant 0 : i32
    return %arg0, %c0_i32 : i32, i32
  }
  func.func @transform_1(%arg0: i32) -> (i32, i32) {
    %c0_i32 = arith.constant 0 : i32
    %c0_i32_0 = arith.constant 0 : i32
    %c0_i32_1 = arith.constant 0 : i32
    return %c0_i32, %c0_i32_0 : i32, i32
  }
  func.func @transform_2(%arg0: i32) -> (i32, i32) {
    %c0_i32 = arith.constant 0 : i32
    %c0_i32_0 = arith.constant 0 : i32
    return %arg0, %c0_i32 : i32, i32
  }
}

</mosaic_0001>

<llo_original>
// kernel: tpu_custom_call.1
$region0: #{tpu_custom_call.1}
  #allocation0 [shape = 'u32[]', space=smem, size = 0x4, offset = 0x4, fixed_abs, tag = 'smem constant byte address 0x4 - core index']
  #allocation1 [shape = 'u32[72,128]{1,0:T(1,128)}', space=vmem, size = 0x9000, scoped, tag = 'internal scratch']
  #allocation2 [shape = 'f32[1,128]{1,0:T(1,128)}', space=vmem, size = 0x200, scoped, tag = 'scratch operand']
  #allocation3 [shape = 'f32[1,128]{1,0:T(1,128)}', space=vmem, size = 0x200, scoped, tag = 'scratch operand']
  %s0 = inlined_call_operand.hbm [shape: f32[8,128], index: 0, kind: input, shape index: {}]
  %s1 = inlined_call_operand.hbm [shape: f32[128,128], index: 1, kind: input, shape index: {}]
  %s2 = inlined_call_operand.hbm [shape: f32[8,128], index: 2, kind: output, shape index: {}]
  %s3 = sld [smem:[#allocation0]]
  $region30: #{tpu_custom_call.1} parent=0
    _
  %s5 = ssub.s32 1, %s3
  %s6 = scalar_select 0, %s5, %s3
  $region1: #{tpu_custom_call.1} parent=0
    #allocation4 [shape = 'u8[4096]{0}', space=vmem, size = 0x1000, scoped, tag = 'input window, operand 0, single buffered']
    #allocation5 [shape = 's32[1]{0}', space=sflag, size = 0x4, scoped, tag = 'scoped memory for tpu_custom_call.1']
    #allocation6 [shape = 's32[1]{0}', space=sflag, size = 0x4, scoped, tag = 'scoped memory for tpu_custom_call.1']
    #allocation7 [shape = 'u8[65536]{0}', space=vmem, size = 0x10000, scoped, tag = 'input window, operand 1, single buffered']
    #allocation8 [shape = 's32[1]{0}', space=sflag, size = 0x4, scoped, tag = 'scoped memory for tpu_custom_call.1']
    #allocation9 [shape = 'u8[4096]{0}', space=vmem, size = 0x1000, scoped, tag = 'output window, operand 0, single buffered']
    %7 = vsyncpa [#allocation5], 0
    %8 = vsyncpa [#allocation8], 0
    %9 = vsyncpa [#allocation6], 0
    // Predicated region
    $region2: #{tpu_custom_call.1} parent=1 // pred_check
      _
    $region3: #{tpu_custom_call.1} parent=1 // pred_check_branch
      %11 = sbr.rel (0) target = $region5
    $region4: #{tpu_custom_call.1} parent=1 // pred_region
      %13 = vsyncadd [#allocation5], 0
      %s15 = sshll.u32 %s0, 4
      %s16 = int_to_ptr.hbm [resolvable:$true] %s15
      %s17 = sshll.u32 [#allocation4], 4
      %s18 = int_to_ptr.vmem [resolvable:$true] %s17
      %20 = dma.hbm_to_vmem [thread:$0]  %s16, 128, %s18, [#allocation5]
    $region5: #{tpu_custom_call.1} parent=1 // pred_fallthru
      _
    // Predicated region
    $region6: #{tpu_custom_call.1} parent=1 // pred_check
      _
    $region7: #{tpu_custom_call.1} parent=1 // pred_check_branch
      %22 = sbr.rel (0) target = $region9
    $region8: #{tpu_custom_call.1} parent=1 // pred_region
      %24 = vsyncadd [#allocation8], 0
      %s25 = sshll.u32 %s1, 4
      %s26 = int_to_ptr.hbm [resolvable:$true] %s25
      %s27 = sshll.u32 [#allocation7], 4
      %s28 = int_to_ptr.vmem [resolvable:$true] %s27
      %33 = dma.hbm_to_vmem [thread:$0]  %s26, 2048, %s28, [#allocation8], 128, 128, 8
    $region9: #{tpu_custom_call.1} parent=1 // pred_fallthru
      _
    // Predicated region
    $region10: #{tpu_custom_call.1} parent=1 // pred_check
      _
    $region11: #{tpu_custom_call.1} parent=1 // pred_check_branch
      %35 = sbr.rel (0) target = $region13
    $region12: #{tpu_custom_call.1} parent=1 // pred_region
      %37 = dma.done [#allocation5], 128
    $region13: #{tpu_custom_call.1} parent=1 // pred_fallthru
      _
    // Predicated region
    $region14: #{tpu_custom_call.1} parent=1 // pred_check
      _
    $region15: #{tpu_custom_call.1} parent=1 // pred_check_branch
      %39 = sbr.rel (0) target = $region17
    $region16: #{tpu_custom_call.1} parent=1 // pred_region
      %41 = dma.done [#allocation8], 2048
    $region17: #{tpu_custom_call.1} parent=1 // pred_fallthru
      _
    %p42 = scmp.eq.s32.totalorder 0, 0
    // Predicated region
    $region18: #{tpu_custom_call.1} parent=1 // pred_check
      %p43 = pneg %p42
    $region19: #{tpu_custom_call.1} parent=1 // pred_check_branch
      %45 = sbr.rel (%p43) target = $region21
    $region20: #{tpu_custom_call.1} parent=1 // pred_region
      %46 = vst [vmem:[#allocation2] sm:$0x1] 0.0
      %47 = vst [vmem:[#allocation3] sm:$0x1] 0.0
    $region21: #{tpu_custom_call.1} parent=1 // pred_fallthru
      _
    %v48 = vld [vmem:[#allocation7] sm:$0xff]
    %v49 = vld [vmem:[#allocation7 + $0x8] sm:$0xff]
    %v50 = vld [vmem:[#allocation7 + $0x10] sm:$0xff]
    %v51 = vld [vmem:[#allocation7 + $0x18] sm:$0xff]
    %v52 = vld [vmem:[#allocation7 + $0x20] sm:$0xff]
    %v53 = vld [vmem:[#allocation7 + $0x28] sm:$0xff]
    %v54 = vld [vmem:[#allocation7 + $0x30] sm:$0xff]
    %v55 = vld [vmem:[#allocation7 + $0x38] sm:$0xff]
    %v56 = vld [vmem:[#allocation7 + $0x40] sm:$0xff]
    %v57 = vld [vmem:[#allocation7 + $0x48] sm:$0xff]
    %v58 = vld [vmem:[#allocation7 + $0x50] sm:$0xff]
    %v59 = vld [vmem:[#allocation7 + $0x58] sm:$0xff]
    %v60 = vld [vmem:[#allocation7 + $0x60] sm:$0xff]
    %v61 = vld [vmem:[#allocation7 + $0x68] sm:$0xff]
    %v62 = vld [vmem:[#allocation7 + $0x70] sm:$0xff]
    %v63 = vld [vmem:[#allocation7 + $0x78] sm:$0xff]
    %v64 = vld [vmem:[#allocation2] sm:$0x1]
    %v65 = vld [vmem:[#allocation3] sm:$0x1]
    %v66 = vld [vmem:[#allocation4] sm:$0x1]
    %v67 = vand.u32 %v63, 4294901760
    %68 = vmatpush.msra.mxu0 %v67
    %v69 = vand.u32 %v62, 4294901760
    %70 = vmatpush.msra.mxu0 %v69
    %v71 = vand.u32 %v61, 4294901760
    %72 = vmatpush.msra.mxu0 %v71
    %v73 = vand.u32 %v60, 4294901760
    %74 = vmatpush.msra.mxu0 %v73
    %v75 = vand.u32 %v59, 4294901760
    %76 = vmatpush.msra.mxu0 %v75
    %v77 = vand.u32 %v58, 4294901760
    %78 = vmatpush.msra.mxu0 %v77
    %v79 = vand.u32 %v57, 4294901760
    %80 = vmatpush.msra.mxu0 %v79
    %v81 = vand.u32 %v56, 4294901760
    %82 = vmatpush.msra.mxu0 %v81
    %v83 = vand.u32 %v55, 4294901760
    %84 = vmatpush.msra.mxu0 %v83
    %v85 = vand.u32 %v54, 4294901760
    %86 = vmatpush.msra.mxu0 %v85
    %v87 = vand.u32 %v53, 4294901760
    %88 = vmatpush.msra.mxu0 %v87
    %v89 = vand.u32 %v52, 4294901760
    %90 = vmatpush.msra.mxu0 %v89
    %v91 = vand.u32 %v51, 4294901760
    %92 = vmatpush.msra.mxu0 %v91
    %v93 = vand.u32 %v50, 4294901760
    %94 = vmatpush.msra.mxu0 %v93
    %v95 = vand.u32 %v49, 4294901760
    %96 = vmatpush.msra.mxu0 %v95
    %v97 = vand.u32 %v48, 4294901760
    %98 = vmatpush.msra.mxu0 %v97
    %v99 = vand.u32 %v64, 4294901760
    %v100 = vsub.f32 %v64, %v99
    %v101 = vand.u32 %v100, 4294901760
    %v102 = vsub.f32 %v100, %v101
    %v103 = vand.u32 %v102, 4294901760
    %104 = vmatmul.f32.gmra.mxu0 %v103
    %v105 = vpop.f32.mrf.mxu0
    %v106 = vadd.f32 %v66, %v105
    %107 = vdwg.mxu0
    %v108 = vand.u32 %v63, 4294901760
    %v109 = vsub.f32 %v63, %v108
    %v110 = vand.u32 %v109, 4294901760
    %v111 = vsub.f32 %v109, %v110
    %v112 = vand.u32 %v111, 4294901760
    %113 = vmatpush.msra.mxu0 %v112
    %v114 = vand.u32 %v62, 4294901760
    %v115 = vsub.f32 %v62, %v114
    %v116 = vand.u32 %v115, 4294901760
    %v117 = vsub.f32 %v115, %v116
    %v118 = vand.u32 %v117, 4294901760
    %119 = vmatpush.msra.mxu0 %v118
    %v120 = vand.u32 %v61, 4294901760
    %v121 = vsub.f32 %v61, %v120
    %v122 = vand.u32 %v121, 4294901760
    %v123 = vsub.f32 %v121, %v122
    %v124 = vand.u32 %v123, 4294901760
    %125 = vmatpush.msra.mxu0 %v124
    %v126 = vand.u32 %v60, 4294901760
    %v127 = vsub.f32 %v60, %v126
    %v128 = vand.u32 %v127, 4294901760
    %v129 = vsub.f32 %v127, %v128
    %v130 = vand.u32 %v129, 4294901760
    %131 = vmatpush.msra.mxu0 %v130
    %v132 = vand.u32 %v59, 4294901760
    %v133 = vsub.f32 %v59, %v132
    %v134 = vand.u32 %v133, 4294901760
    %v135 = vsub.f32 %v133, %v134
    %v136 = vand.u32 %v135, 4294901760
    %137 = vmatpush.msra.mxu0 %v136
    %v138 = vand.u32 %v58, 4294901760
    %v139 = vsub.f32 %v58, %v138
    %v140 = vand.u32 %v139, 4294901760
    %v141 = vsub.f32 %v139, %v140
    %v142 = vand.u32 %v141, 4294901760
    %143 = vmatpush.msra.mxu0 %v142
    %v144 = vand.u32 %v57, 4294901760
    %v145 = vsub.f32 %v57, %v144
    %v146 = vand.u32 %v145, 4294901760
    %v147 = vsub.f32 %v145, %v146
    %v148 = vand.u32 %v147, 4294901760
    %149 = vmatpush.msra.mxu0 %v148
    %v150 = vand.u32 %v56, 4294901760
    %v151 = vsub.f32 %v56, %v150
    %v152 = vand.u32 %v151, 4294901760
    %v153 = vsub.f32 %v151, %v152
    %v154 = vand.u32 %v153, 4294901760
    %155 = vmatpush.msra.mxu0 %v154
    %v156 = vand.u32 %v55, 4294901760
    %v157 = vsub.f32 %v55, %v156
    %v158 = vand.u32 %v157, 4294901760
    %v159 = vsub.f32 %v157, %v158
    %v160 = vand.u32 %v159, 4294901760
    %161 = vmatpush.msra.mxu0 %v160
    %v162 = vand.u32 %v54, 4294901760
    %v163 = vsub.f32 %v54, %v162
    %v164 = vand.u32 %v163, 4294901760
    %v165 = vsub.f32 %v163, %v164
    %v166 = vand.u32 %v165, 4294901760
    %167 = vmatpush.msra.mxu0 %v166
    %v168 = vand.u32 %v53, 4294901760
    %v169 = vsub.f32 %v53, %v168
    %v170 = vand.u32 %v169, 4294901760
    %v171 = vsub.f32 %v169, %v170
    %v172 = vand.u32 %v171, 4294901760
    %173 = vmatpush.msra.mxu0 %v172
    %v174 = vand.u32 %v52, 4294901760
    %v175 = vsub.f32 %v52, %v174
    %v176 = vand.u32 %v175, 4294901760
    %v177 = vsub.f32 %v175, %v176
    %v178 = vand.u32 %v177, 4294901760
    %179 = vmatpush.msra.mxu0 %v178
    %v180 = vand.u32 %v51, 4294901760
    %v181 = vsub.f32 %v51, %v180
    %v182 = vand.u32 %v181, 4294901760
    %v183 = vsub.f32 %v181, %v182
    %v184 = vand.u32 %v183, 4294901760
    %185 = vmatpush.msra.mxu0 %v184
    %v186 = vand.u32 %v50, 4294901760
    %v187 = vsub.f32 %v50, %v186
    %v188 = vand.u32 %v187, 4294901760
    %v189 = vsub.f32 %v187, %v188
    %v190 = vand.u32 %v189, 4294901760
    %191 = vmatpush.msra.mxu0 %v190
    %v192 = vand.u32 %v49, 4294901760
    %v193 = vsub.f32 %v49, %v192
    %v194 = vand.u32 %v193, 4294901760
    %v195 = vsub.f32 %v193, %v194
    %v196 = vand.u32 %v195, 4294901760
    %197 = vmatpush.msra.mxu0 %v196
    %v198 = vand.u32 %v48, 4294901760
    %v199 = vsub.f32 %v48, %v198
    %v200 = vand.u32 %v199, 4294901760
    %v201 = vsub.f32 %v199, %v200
    %v202 = vand.u32 %v201, 4294901760
    %203 = vmatpush.msra.mxu0 %v202
    %v204 = vand.u32 %v64, 4294901760
    %205 = vmatmul.f32.gmra.mxu0 %v204
    %v206 = vpop.f32.mrf.mxu0
    %v207 = vadd.f32 %v106, %v206
    %208 = vdwg.mxu0
    %v209 = vand.u32 %v63, 4294901760
    %v210 = vsub.f32 %v63, %v209
    %211 = vmatpush.msra.mxu0 %v210
    %v212 = vand.u32 %v62, 4294901760
    %v213 = vsub.f32 %v62, %v212
    %214 = vmatpush.msra.mxu0 %v213
    %v215 = vand.u32 %v61, 4294901760
    %v216 = vsub.f32 %v61, %v215
    %217 = vmatpush.msra.mxu0 %v216
    %v218 = vand.u32 %v60, 4294901760
    %v219 = vsub.f32 %v60, %v218
    %220 = vmatpush.msra.mxu0 %v219
    %v221 = vand.u32 %v59, 4294901760
    %v222 = vsub.f32 %v59, %v221
    %223 = vmatpush.msra.mxu0 %v222
    %v224 = vand.u32 %v58, 4294901760
    %v225 = vsub.f32 %v58, %v224
    %226 = vmatpush.msra.mxu0 %v225
    %v227 = vand.u32 %v57, 4294901760
    %v228 = vsub.f32 %v57, %v227
    %229 = vmatpush.msra.mxu0 %v228
    %v230 = vand.u32 %v56, 4294901760
    %v231 = vsub.f32 %v56, %v230
    %232 = vmatpush.msra.mxu0 %v231
    %v233 = vand.u32 %v55, 4294901760
    %v234 = vsub.f32 %v55, %v233
    %235 = vmatpush.msra.mxu0 %v234
    %v236 = vand.u32 %v54, 4294901760
    %v237 = vsub.f32 %v54, %v236
    %238 = vmatpush.msra.mxu0 %v237
    %v239 = vand.u32 %v53, 4294901760
    %v240 = vsub.f32 %v53, %v239
    %241 = vmatpush.msra.mxu0 %v240
    %v242 = vand.u32 %v52, 4294901760
    %v243 = vsub.f32 %v52, %v242
    %244 = vmatpush.msra.mxu0 %v243
    %v245 = vand.u32 %v51, 4294901760
    %v246 = vsub.f32 %v51, %v245
    %247 = vmatpush.msra.mxu0 %v246
    %v248 = vand.u32 %v50, 4294901760
    %v249 = vsub.f32 %v50, %v248
    %250 = vmatpush.msra.mxu0 %v249
    %v251 = vand.u32 %v49, 4294901760
    %v252 = vsub.f32 %v49, %v251
    %253 = vmatpush.msra.mxu0 %v252
    %v254 = vand.u32 %v48, 4294901760
    %v255 = vsub.f32 %v48, %v254
    %256 = vmatpush.msra.mxu0 %v255
    %v257 = vand.u32 %v64, 4294901760
    %v258 = vsub.f32 %v64, %v257
    %259 = vmatmul.f32.gmra.mxu0 %v258
    %v260 = vpop.f32.mrf.mxu0
    %v261 = vadd.f32 %v207, %v260
    %262 = vdwg.mxu0
    %v263 = vand.u32 %v63, 4294901760
    %264 = vmatpush.msra.mxu0 %v263
    %v265 = vand.u32 %v62, 4294901760
    %266 = vmatpush.msra.mxu0 %v265
    %v267 = vand.u32 %v61, 4294901760
    %268 = vmatpush.msra.mxu0 %v267
    %v269 = vand.u32 %v60, 4294901760
    %270 = vmatpush.msra.mxu0 %v269
    %v271 = vand.u32 %v59, 4294901760
    %272 = vmatpush.msra.mxu0 %v271
    %v273 = vand.u32 %v58, 4294901760
    %274 = vmatpush.msra.mxu0 %v273
    %v275 = vand.u32 %v57, 4294901760
    %276 = vmatpush.msra.mxu0 %v275
    %v277 = vand.u32 %v56, 4294901760
    %278 = vmatpush.msra.mxu0 %v277
    %v279 = vand.u32 %v55, 4294901760
    %280 = vmatpush.msra.mxu0 %v279
    %v281 = vand.u32 %v54, 4294901760
    %282 = vmatpush.msra.mxu0 %v281
    %v283 = vand.u32 %v53, 4294901760
    %284 = vmatpush.msra.mxu0 %v283
    %v285 = vand.u32 %v52, 4294901760
    %286 = vmatpush.msra.mxu0 %v285
    %v287 = vand.u32 %v51, 4294901760
    %288 = vmatpush.msra.mxu0 %v287
    %v289 = vand.u32 %v50, 4294901760
    %290 = vmatpush.msra.mxu0 %v289
    %v291 = vand.u32 %v49, 4294901760
    %292 = vmatpush.msra.mxu0 %v291
    %v293 = vand.u32 %v48, 4294901760
    %294 = vmatpush.msra.mxu0 %v293
    %v295 = vand.u32 %v64, 4294901760
    %v296 = vsub.f32 %v64, %v295
    %v297 = vand.u32 %v296, 4294901760
    %298 = vmatmul.f32.gmra.mxu0 %v297
    %v299 = vpop.f32.mrf.mxu0
    %v300 = vadd.f32 %v261, %v299
    %301 = vdwg.mxu0
    %v302 = vand.u32 %v63, 4294901760
    %v303 = vsub.f32 %v63, %v302
    %v304 = vand.u32 %v303, 4294901760
    %305 = vmatpush.msra.mxu0 %v304
    %v306 = vand.u32 %v62, 4294901760
    %v307 = vsub.f32 %v62, %v306
    %v308 = vand.u32 %v307, 4294901760
    %309 = vmatpush.msra.mxu0 %v308
    %v310 = vand.u32 %v61, 4294901760
    %v311 = vsub.f32 %v61, %v310
    %v312 = vand.u32 %v311, 4294901760
    %313 = vmatpush.msra.mxu0 %v312
    %v314 = vand.u32 %v60, 4294901760
    %v315 = vsub.f32 %v60, %v314
    %v316 = vand.u32 %v315, 4294901760
    %317 = vmatpush.msra.mxu0 %v316
    %v318 = vand.u32 %v59, 4294901760
    %v319 = vsub.f32 %v59, %v318
    %v320 = vand.u32 %v319, 4294901760
    %321 = vmatpush.msra.mxu0 %v320
    %v322 = vand.u32 %v58, 4294901760
    %v323 = vsub.f32 %v58, %v322
    %v324 = vand.u32 %v323, 4294901760
    %325 = vmatpush.msra.mxu0 %v324
    %v326 = vand.u32 %v57, 4294901760
    %v327 = vsub.f32 %v57, %v326
    %v328 = vand.u32 %v327, 4294901760
    %329 = vmatpush.msra.mxu0 %v328
    %v330 = vand.u32 %v56, 4294901760
    %v331 = vsub.f32 %v56, %v330
    %v332 = vand.u32 %v331, 4294901760
    %333 = vmatpush.msra.mxu0 %v332
    %v334 = vand.u32 %v55, 4294901760
    %v335 = vsub.f32 %v55, %v334
    %v336 = vand.u32 %v335, 4294901760
    %337 = vmatpush.msra.mxu0 %v336
    %v338 = vand.u32 %v54, 4294901760
    %v339 = vsub.f32 %v54, %v338
    %v340 = vand.u32 %v339, 4294901760
    %341 = vmatpush.msra.mxu0 %v340
    %v342 = vand.u32 %v53, 4294901760
    %v343 = vsub.f32 %v53, %v342
    %v344 = vand.u32 %v343, 4294901760
    %345 = vmatpush.msra.mxu0 %v344
    %v346 = vand.u32 %v52, 4294901760
    %v347 = vsub.f32 %v52, %v346
    %v348 = vand.u32 %v347, 4294901760
    %349 = vmatpush.msra.mxu0 %v348
    %v350 = vand.u32 %v51, 4294901760
    %v351 = vsub.f32 %v51, %v350
    %v352 = vand.u32 %v351, 4294901760
    %353 = vmatpush.msra.mxu0 %v352
    %v354 = vand.u32 %v50, 4294901760
    %v355 = vsub.f32 %v50, %v354
    %v356 = vand.u32 %v355, 4294901760
    %357 = vmatpush.msra.mxu0 %v356
    %v358 = vand.u32 %v49, 4294901760
    %v359 = vsub.f32 %v49, %v358
    %v360 = vand.u32 %v359, 4294901760
    %361 = vmatpush.msra.mxu0 %v360
    %v362 = vand.u32 %v48, 4294901760
    %v363 = vsub.f32 %v48, %v362
    %v364 = vand.u32 %v363, 4294901760
    %365 = vmatpush.msra.mxu0 %v364
    %v366 = vand.u32 %v64, 4294901760
    %367 = vmatmul.f32.gmra.mxu0 %v366
    %v368 = vpop.f32.mrf.mxu0
    %v369 = vadd.f32 %v300, %v368
    %370 = vdwg.mxu0
    %v371 = vand.u32 %v63, 4294901760
    %372 = vmatpush.msra.mxu0 %v371
    %v373 = vand.u32 %v62, 4294901760
    %374 = vmatpush.msra.mxu0 %v373
    %v375 = vand.u32 %v61, 4294901760
    %376 = vmatpush.msra.mxu0 %v375
    %v377 = vand.u32 %v60, 4294901760
    %378 = vmatpush.msra.mxu0 %v377
    %v379 = vand.u32 %v59, 4294901760
    %380 = vmatpush.msra.mxu0 %v379
    %v381 = vand.u32 %v58, 4294901760
    %382 = vmatpush.msra.mxu0 %v381
    %v383 = vand.u32 %v57, 4294901760
    %384 = vmatpush.msra.mxu0 %v383
    %v385 = vand.u32 %v56, 4294901760
    %386 = vmatpush.msra.mxu0 %v385
    %v387 = vand.u32 %v55, 4294901760
    %388 = vmatpush.msra.mxu0 %v387
    %v389 = vand.u32 %v54, 4294901760
    %390 = vmatpush.msra.mxu0 %v389
    %v391 = vand.u32 %v53, 4294901760
    %392 = vmatpush.msra.mxu0 %v391
    %v393 = vand.u32 %v52, 4294901760
    %394 = vmatpush.msra.mxu0 %v393
    %v395 = vand.u32 %v51, 4294901760
    %396 = vmatpush.msra.mxu0 %v395
    %v397 = vand.u32 %v50, 4294901760
    %398 = vmatpush.msra.mxu0 %v397
    %v399 = vand.u32 %v49, 4294901760
    %400 = vmatpush.msra.mxu0 %v399
    %v401 = vand.u32 %v48, 4294901760
    %402 = vmatpush.msra.mxu0 %v401
    %v403 = vand.u32 %v64, 4294901760
    %404 = vmatmul.f32.gmra.mxu0 %v403
    %v405 = vpop.f32.mrf.mxu0
    %v406 = vadd.f32 %v369, %v405
    %407 = vdwg.mxu0
    %v408 = vtanh.pop %v406
    %v409 = vmul.f32 %v408, 0.001
    %v410 = vadd.f32 %v65, %v409
    %v411 = vmul.f32 %v410, 0.5
    %v412 = vadd.f32 %v411, 1.0
    %v413 = vmul.f32 %v412, %v408
    %414 = vst [vmem:[#allocation9] sm:$0x1] %v413
    %s415 = sadd.s32 0, 1
    %s416 = scalar_lea.vmem [#allocation4], %s415
    %v417 = vld [vmem:[%s416] sm:$0x1]
    %v418 = vand.u32 %v63, 4294901760
    %419 = vmatpush.msra.mxu0 %v418
    %v420 = vand.u32 %v62, 4294901760
    %421 = vmatpush.msra.mxu0 %v420
    %v422 = vand.u32 %v61, 4294901760
    %423 = vmatpush.msra.mxu0 %v422
    %v424 = vand.u32 %v60, 4294901760
    %425 = vmatpush.msra.mxu0 %v424
    %v426 = vand.u32 %v59, 4294901760
    %427 = vmatpush.msra.mxu0 %v426
    %v428 = vand.u32 %v58, 4294901760
    %429 = vmatpush.msra.mxu0 %v428
    %v430 = vand.u32 %v57, 4294901760
    %431 = vmatpush.msra.mxu0 %v430
    %v432 = vand.u32 %v56, 4294901760
    %433 = vmatpush.msra.mxu0 %v432
    %v434 = vand.u32 %v55, 4294901760
    %435 = vmatpush.msra.mxu0 %v434
    %v436 = vand.u32 %v54, 4294901760
    %437 = vmatpush.msra.mxu0 %v436
    %v438 = vand.u32 %v53, 4294901760
    %439 = vmatpush.msra.mxu0 %v438
    %v440 = vand.u32 %v52, 4294901760
    %441 = vmatpush.msra.mxu0 %v440
    %v442 = vand.u32 %v51, 4294901760
    %443 = vmatpush.msra.mxu0 %v442
    %v444 = vand.u32 %v50, 4294901760
    %445 = vmatpush.msra.mxu0 %v444
    %v446 = vand.u32 %v49, 4294901760
    %447 = vmatpush.msra.mxu0 %v446
    %v448 = vand.u32 %v48, 4294901760
    %449 = vmatpush.msra.mxu0 %v448
    %v450 = vand.u32 %v413, 4294901760
    %v451 = vsub.f32 %v413, %v450
    %v452 = vand.u32 %v451, 4294901760
    %v453 = vsub.f32 %v451, %v452
    %v454 = vand.u32 %v453, 4294901760
    %455 = vmatmul.f32.gmra.mxu0 %v454
    %v456 = vpop.f32.mrf.mxu0
    %v457 = vadd.f32 %v417, %v456
    %458 = vdwg.mxu0
    %v459 = vand.u32 %v63, 4294901760
    %v460 = vsub.f32 %v63, %v459
    %v461 = vand.u32 %v460, 4294901760
    %v462 = vsub.f32 %v460, %v461
    %v463 = vand.u32 %v462, 4294901760
    %464 = vmatpush.msra.mxu0 %v463
    %v465 = vand.u32 %v62, 4294901760
    %v466 = vsub.f32 %v62, %v465
    %v467 = vand.u32 %v466, 4294901760
    %v468 = vsub.f32 %v466, %v467
    %v469 = vand.u32 %v468, 4294901760
    %470 = vmatpush.msra.mxu0 %v469
    %v471 = vand.u32 %v61, 4294901760
    %v472 = vsub.f32 %v61, %v471
    %v473 = vand.u32 %v472, 4294901760
    %v474 = vsub.f32 %v472, %v473
    %v475 = vand.u32 %v474, 4294901760
    %476 = vmatpush.msra.mxu0 %v475
    %v477 = vand.u32 %v60, 4294901760
    %v478 = vsub.f32 %v60, %v477
    %v479 = vand.u32 %v478, 4294901760
    %v480 = vsub.f32 %v478, %v479
    %v481 = vand.u32 %v480, 4294901760
    %482 = vmatpush.msra.mxu0 %v481
    %v483 = vand.u32 %v59, 4294901760
    %v484 = vsub.f32 %v59, %v483
    %v485 = vand.u32 %v484, 4294901760
    %v486 = vsub.f32 %v484, %v485
    %v487 = vand.u32 %v486, 4294901760
    %488 = vmatpush.msra.mxu0 %v487
    %v489 = vand.u32 %v58, 4294901760
    %v490 = vsub.f32 %v58, %v489
    %v491 = vand.u32 %v490, 4294901760
    %v492 = vsub.f32 %v490, %v491
    %v493 = vand.u32 %v492, 4294901760
    %494 = vmatpush.msra.mxu0 %v493
    %v495 = vand.u32 %v57, 4294901760
    %v496 = vsub.f32 %v57, %v495
    %v497 = vand.u32 %v496, 4294901760
    %v498 = vsub.f32 %v496, %v497
    %v499 = vand.u32 %v498, 4294901760
    %500 = vmatpush.msra.mxu0 %v499
    %v501 = vand.u32 %v56, 4294901760
    %v502 = vsub.f32 %v56, %v501
    %v503 = vand.u32 %v502, 4294901760
    %v504 = vsub.f32 %v502, %v503
    %v505 = vand.u32 %v504, 4294901760
    %506 = vmatpush.msra.mxu0 %v505
    %v507 = vand.u32 %v55, 4294901760
    %v508 = vsub.f32 %v55, %v507
    %v509 = vand.u32 %v508, 4294901760
    %v510 = vsub.f32 %v508, %v509
    %v511 = vand.u32 %v510, 4294901760
    %512 = vmatpush.msra.mxu0 %v511
    %v513 = vand.u32 %v54, 4294901760
    %v514 = vsub.f32 %v54, %v513
    %v515 = vand.u32 %v514, 4294901760
    %v516 = vsub.f32 %v514, %v515
    %v517 = vand.u32 %v516, 4294901760
    %518 = vmatpush.msra.mxu0 %v517
    %v519 = vand.u32 %v53, 4294901760
    %v520 = vsub.f32 %v53, %v519
    %v521 = vand.u32 %v520, 4294901760
    %v522 = vsub.f32 %v520, %v521
    %v523 = vand.u32 %v522, 4294901760
    %524 = vmatpush.msra.mxu0 %v523
    %v525 = vand.u32 %v52, 4294901760
    %v526 = vsub.f32 %v52, %v525
    %v527 = vand.u32 %v526, 4294901760
    %v528 = vsub.f32 %v526, %v527
    %v529 = vand.u32 %v528, 4294901760
    %530 = vmatpush.msra.mxu0 %v529
    %v531 = vand.u32 %v51, 4294901760
    %v532 = vsub.f32 %v51, %v531
    %v533 = vand.u32 %v532, 4294901760
    %v534 = vsub.f32 %v532, %v533
    %v535 = vand.u32 %v534, 4294901760
    %536 = vmatpush.msra.mxu0 %v535
    %v537 = vand.u32 %v50, 4294901760
    %v538 = vsub.f32 %v50, %v537
    %v539 = vand.u32 %v538, 4294901760
    %v540 = vsub.f32 %v538, %v539
    %v541 = vand.u32 %v540, 4294901760
    %542 = vmatpush.msra.mxu0 %v541
    %v543 = vand.u32 %v49, 4294901760
    %v544 = vsub.f32 %v49, %v543
    %v545 = vand.u32 %v544, 4294901760
    %v546 = vsub.f32 %v544, %v545
    %v547 = vand.u32 %v546, 4294901760
    %548 = vmatpush.msra.mxu0 %v547
    %v549 = vand.u32 %v48, 4294901760
    %v550 = vsub.f32 %v48, %v549
    %v551 = vand.u32 %v550, 4294901760
    %v552 = vsub.f32 %v550, %v551
    %v553 = vand.u32 %v552, 4294901760
    %554 = vmatpush.msra.mxu0 %v553
    %v555 = vand.u32 %v413, 4294901760
    %556 = vmatmul.f32.gmra.mxu0 %v555
    %v557 = vpop.f32.mrf.mxu0
    %v558 = vadd.f32 %v457, %v557
    %559 = vdwg.mxu0
    %v560 = vand.u32 %v63, 4294901760
    %v561 = vsub.f32 %v63, %v560
    %562 = vmatpush.msra.mxu0 %v561
    %v563 = vand.u32 %v62, 4294901760
    %v564 = vsub.f32 %v62, %v563
    %565 = vmatpush.msra.mxu0 %v564
    %v566 = vand.u32 %v61, 4294901760
    %v567 = vsub.f32 %v61, %v566
    %568 = vmatpush.msra.mxu0 %v567
    %v569 = vand.u32 %v60, 4294901760
    %v570 = vsub.f32 %v60, %v569
    %571 = vmatpush.msra.mxu0 %v570
    %v572 = vand.u32 %v59, 4294901760
    %v573 = vsub.f32 %v59, %v572
    %574 = vmatpush.msra.mxu0 %v573
    %v575 = vand.u32 %v58, 4294901760
    %v576 = vsub.f32 %v58, %v575
    %577 = vmatpush.msra.mxu0 %v576
    %v578 = vand.u32 %v57, 4294901760
    %v579 = vsub.f32 %v57, %v578
    %580 = vmatpush.msra.mxu0 %v579
    %v581 = vand.u32 %v56, 4294901760
    %v582 = vsub.f32 %v56, %v581
    %583 = vmatpush.msra.mxu0 %v582
    %v584 = vand.u32 %v55, 4294901760
    %v585 = vsub.f32 %v55, %v584
    %586 = vmatpush.msra.mxu0 %v585
    %v587 = vand.u32 %v54, 4294901760
    %v588 = vsub.f32 %v54, %v587
    %589 = vmatpush.msra.mxu0 %v588
    %v590 = vand.u32 %v53, 4294901760
    %v591 = vsub.f32 %v53, %v590
    %592 = vmatpush.msra.mxu0 %v591
    %v593 = vand.u32 %v52, 4294901760
    %v594 = vsub.f32 %v52, %v593
    %595 = vmatpush.msra.mxu0 %v594
    %v596 = vand.u32 %v51, 4294901760
    %v597 = vsub.f32 %v51, %v596
    %598 = vmatpush.msra.mxu0 %v597
    %v599 = vand.u32 %v50, 4294901760
    %v600 = vsub.f32 %v50, %v599
    %601 = vmatpush.msra.mxu0 %v600
    %v602 = vand.u32 %v49, 4294901760
    %v603 = vsub.f32 %v49, %v602
    %604 = vmatpush.msra.mxu0 %v603
    %v605 = vand.u32 %v48, 4294901760
    %v606 = vsub.f32 %v48, %v605
    %607 = vmatpush.msra.mxu0 %v606
    %v608 = vand.u32 %v413, 4294901760
    %v609 = vsub.f32 %v413, %v608
    %610 = vmatmul.f32.gmra.mxu0 %v609
    %v611 = vpop.f32.mrf.mxu0
    %v612 = vadd.f32 %v558, %v611
    %613 = vdwg.mxu0
    %v614 = vand.u32 %v63, 4294901760
    %615 = vmatpush.msra.mxu0 %v614
    %v616 = vand.u32 %v62, 4294901760
    %617 = vmatpush.msra.mxu0 %v616
    %v618 = vand.u32 %v61, 4294901760
    %619 = vmatpush.msra.mxu0 %v618
    %v620 = vand.u32 %v60, 4294901760
    %621 = vmatpush.msra.mxu0 %v620
    %v622 = vand.u32 %v59, 4294901760
    %623 = vmatpush.msra.mxu0 %v622
    %v624 = vand.u32 %v58, 4294901760
    %625 = vmatpush.msra.mxu0 %v624
    %v626 = vand.u32 %v57, 4294901760
    %627 = vmatpush.msra.mxu0 %v626
    %v628 = vand.u32 %v56, 4294901760
    %629 = vmatpush.msra.mxu0 %v628
    %v630 = vand.u32 %v55, 4294901760
    %631 = vmatpush.msra.mxu0 %v630
    %v632 = vand.u32 %v54, 4294901760
    %633 = vmatpush.msra.mxu0 %v632
    %v634 = vand.u32 %v53, 4294901760
    %635 = vmatpush.msra.mxu0 %v634
    %v636 = vand.u32 %v52, 4294901760
    %637 = vmatpush.msra.mxu0 %v636
    %v638 = vand.u32 %v51, 4294901760
    %639 = vmatpush.msra.mxu0 %v638
    %v640 = vand.u32 %v50, 4294901760
    %641 = vmatpush.msra.mxu0 %v640
    %v642 = vand.u32 %v49, 4294901760
    %643 = vmatpush.msra.mxu0 %v642
    %v644 = vand.u32 %v48, 4294901760
    %645 = vmatpush.msra.mxu0 %v644
    %v646 = vand.u32 %v413, 4294901760
    %v647 = vsub.f32 %v413, %v646
    %v648 = vand.u32 %v647, 4294901760
    %649 = vmatmul.f32.gmra.mxu0 %v648
    %v650 = vpop.f32.mrf.mxu0
    %v651 = vadd.f32 %v612, %v650
    %652 = vdwg.mxu0
    %v653 = vand.u32 %v63, 4294901760
    %v654 = vsub.f32 %v63, %v653
    %v655 = vand.u32 %v654, 4294901760
    %656 = vmatpush.msra.mxu0 %v655
    %v657 = vand.u32 %v62, 4294901760
    %v658 = vsub.f32 %v62, %v657
    %v659 = vand.u32 %v658, 4294901760
    %660 = vmatpush.msra.mxu0 %v659
    %v661 = vand.u32 %v61, 4294901760
    %v662 = vsub.f32 %v61, %v661
    %v663 = vand.u32 %v662, 4294901760
    %664 = vmatpush.msra.mxu0 %v663
    %v665 = vand.u32 %v60, 4294901760
    %v666 = vsub.f32 %v60, %v665
    %v667 = vand.u32 %v666, 4294901760
    %668 = vmatpush.msra.mxu0 %v667
    %v669 = vand.u32 %v59, 4294901760
    %v670 = vsub.f32 %v59, %v669
    %v671 = vand.u32 %v670, 4294901760
    %672 = vmatpush.msra.mxu0 %v671
    %v673 = vand.u32 %v58, 4294901760
    %v674 = vsub.f32 %v58, %v673
    %v675 = vand.u32 %v674, 4294901760
    %676 = vmatpush.msra.mxu0 %v675
    %v677 = vand.u32 %v57, 4294901760
    %v678 = vsub.f32 %v57, %v677
    %v679 = vand.u32 %v678, 4294901760
    %680 = vmatpush.msra.mxu0 %v679
    %v681 = vand.u32 %v56, 4294901760
    %v682 = vsub.f32 %v56, %v681
    %v683 = vand.u32 %v682, 4294901760
    %684 = vmatpush.msra.mxu0 %v683
    %v685 = vand.u32 %v55, 4294901760
    %v686 = vsub.f32 %v55, %v685
    %v687 = vand.u32 %v686, 4294901760
    %688 = vmatpush.msra.mxu0 %v687
    %v689 = vand.u32 %v54, 4294901760
    %v690 = vsub.f32 %v54, %v689
    %v691 = vand.u32 %v690, 4294901760
    %692 = vmatpush.msra.mxu0 %v691
    %v693 = vand.u32 %v53, 4294901760
    %v694 = vsub.f32 %v53, %v693
    %v695 = vand.u32 %v694, 4294901760
    %696 = vmatpush.msra.mxu0 %v695
    %v697 = vand.u32 %v52, 4294901760
    %v698 = vsub.f32 %v52, %v697
    %v699 = vand.u32 %v698, 4294901760
    %700 = vmatpush.msra.mxu0 %v699
    %v701 = vand.u32 %v51, 4294901760
    %v702 = vsub.f32 %v51, %v701
    %v703 = vand.u32 %v702, 4294901760
    %704 = vmatpush.msra.mxu0 %v703
    %v705 = vand.u32 %v50, 4294901760
    %v706 = vsub.f32 %v50, %v705
    %v707 = vand.u32 %v706, 4294901760
    %708 = vmatpush.msra.mxu0 %v707
    %v709 = vand.u32 %v49, 4294901760
    %v710 = vsub.f32 %v49, %v709
    %v711 = vand.u32 %v710, 4294901760
    %712 = vmatpush.msra.mxu0 %v711
    %v713 = vand.u32 %v48, 4294901760
    %v714 = vsub.f32 %v48, %v713
    %v715 = vand.u32 %v714, 4294901760
    %716 = vmatpush.msra.mxu0 %v715
    %v717 = vand.u32 %v413, 4294901760
    %718 = vmatmul.f32.gmra.mxu0 %v717
    %v719 = vpop.f32.mrf.mxu0
    %v720 = vadd.f32 %v651, %v719
    %721 = vdwg.mxu0
    %v722 = vand.u32 %v63, 4294901760
    %723 = vmatpush.msra.mxu0 %v722
    %v724 = vand.u32 %v62, 4294901760
    %725 = vmatpush.msra.mxu0 %v724
    %v726 = vand.u32 %v61, 4294901760
    %727 = vmatpush.msra.mxu0 %v726
    %v728 = vand.u32 %v60, 4294901760
    %729 = vmatpush.msra.mxu0 %v728
    %v730 = vand.u32 %v59, 4294901760
    %731 = vmatpush.msra.mxu0 %v730
    %v732 = vand.u32 %v58, 4294901760
    %733 = vmatpush.msra.mxu0 %v732
    %v734 = vand.u32 %v57, 4294901760
    %735 = vmatpush.msra.mxu0 %v734
    %v736 = vand.u32 %v56, 4294901760
    %737 = vmatpush.msra.mxu0 %v736
    %v738 = vand.u32 %v55, 4294901760
    %739 = vmatpush.msra.mxu0 %v738
    %v740 = vand.u32 %v54, 4294901760
    %741 = vmatpush.msra.mxu0 %v740
    %v742 = vand.u32 %v53, 4294901760
    %743 = vmatpush.msra.mxu0 %v742
    %v744 = vand.u32 %v52, 4294901760
    %745 = vmatpush.msra.mxu0 %v744
    %v746 = vand.u32 %v51, 4294901760
    %747 = vmatpush.msra.mxu0 %v746
    %v748 = vand.u32 %v50, 4294901760
    %749 = vmatpush.msra.mxu0 %v748
    %v750 = vand.u32 %v49, 4294901760
    %751 = vmatpush.msra.mxu0 %v750
    %v752 = vand.u32 %v48, 4294901760
    %753 = vmatpush.msra.mxu0 %v752
    %v754 = vand.u32 %v413, 4294901760
    %755 = vmatmul.f32.gmra.mxu0 %v754
    %v756 = vpop.f32.mrf.mxu0
    %v757 = vadd.f32 %v720, %v756
    %758 = vdwg.mxu0
    %v759 = vtanh.pop %v757
    %v760 = vmul.f32 %v759, 0.001
    %v761 = vadd.f32 %v410, %v760
    %v762 = vmul.f32 %v761, 0.5
    %v763 = vadd.f32 %v762, 1.0
    %v764 = vmul.f32 %v763, %v759
    %s765 = scalar_lea.vmem [#allocation9], %s415
    %766 = vst [vmem:[%s765] sm:$0x1] %v764
    %s767 = sadd.s32 0, 2
    %s768 = scalar_lea.vmem [#allocation4], %s767
    %v769 = vld [vmem:[%s768] sm:$0x1]
    %v770 = vand.u32 %v63, 4294901760
    %771 = vmatpush.msra.mxu0 %v770
    %v772 = vand.u32 %v62, 4294901760
    %773 = vmatpush.msra.mxu0 %v772
    %v774 = vand.u32 %v61, 4294901760
    %775 = vmatpush.msra.mxu0 %v774
    %v776 = vand.u32 %v60, 4294901760
    %777 = vmatpush.msra.mxu0 %v776
    %v778 = vand.u32 %v59, 4294901760
    %779 = vmatpush.msra.mxu0 %v778
    %v780 = vand.u32 %v58, 4294901760
    %781 = vmatpush.msra.mxu0 %v780
    %v782 = vand.u32 %v57, 4294901760
    %783 = vmatpush.msra.mxu0 %v782
    %v784 = vand.u32 %v56, 4294901760
    %785 = vmatpush.msra.mxu0 %v784
    %v786 = vand.u32 %v55, 4294901760
    %787 = vmatpush.msra.mxu0 %v786
    %v788 = vand.u32 %v54, 4294901760
    %789 = vmatpush.msra.mxu0 %v788
    %v790 = vand.u32 %v53, 4294901760
    %791 = vmatpush.msra.mxu0 %v790
    %v792 = vand.u32 %v52, 4294901760
    %793 = vmatpush.msra.mxu0 %v792
    %v794 = vand.u32 %v51, 4294901760
    %795 = vmatpush.msra.mxu0 %v794
    %v796 = vand.u32 %v50, 4294901760
    %797 = vmatpush.msra.mxu0 %v796
    %v798 = vand.u32 %v49, 4294901760
    %799 = vmatpush.msra.mxu0 %v798
    %v800 = vand.u32 %v48, 4294901760
    %801 = vmatpush.msra.mxu0 %v800
    %v802 = vand.u32 %v764, 4294901760
    %v803 = vsub.f32 %v764, %v802
    %v804 = vand.u32 %v803, 4294901760
    %v805 = vsub.f32 %v803, %v804
    %v806 = vand.u32 %v805, 4294901760
    %807 = vmatmul.f32.gmra.mxu0 %v806
    %v808 = vpop.f32.mrf.mxu0
    %v809 = vadd.f32 %v769, %v808
    %810 = vdwg.mxu0
    %v811 = vand.u32 %v63, 4294901760
    %v812 = vsub.f32 %v63, %v811
    %v813 = vand.u32 %v812, 4294901760
    %v814 = vsub.f32 %v812, %v813
    %v815 = vand.u32 %v814, 4294901760
    %816 = vmatpush.msra.mxu0 %v815
    %v817 = vand.u32 %v62, 4294901760
    %v818 = vsub.f32 %v62, %v817
    %v819 = vand.u32 %v818, 4294901760
    %v820 = vsub.f32 %v818, %v819
    %v821 = vand.u32 %v820, 4294901760
    %822 = vmatpush.msra.mxu0 %v821
    %v823 = vand.u32 %v61, 4294901760
    %v824 = vsub.f32 %v61, %v823
    %v825 = vand.u32 %v824, 4294901760
    %v826 = vsub.f32 %v824, %v825
    %v827 = vand.u32 %v826, 4294901760
    %828 = vmatpush.msra.mxu0 %v827
    %v829 = vand.u32 %v60, 4294901760
    %v830 = vsub.f32 %v60, %v829
    %v831 = vand.u32 %v830, 4294901760
    %v832 = vsub.f32 %v830, %v831
    %v833 = vand.u32 %v832, 4294901760
    %834 = vmatpush.msra.mxu0 %v833
    %v835 = vand.u32 %v59, 4294901760
    %v836 = vsub.f32 %v59, %v835
    %v837 = vand.u32 %v836, 4294901760
    %v838 = vsub.f32 %v836, %v837
    %v839 = vand.u32 %v838, 4294901760
    %840 = vmatpush.msra.mxu0 %v839
    %v841 = vand.u32 %v58, 4294901760
    %v842 = vsub.f32 %v58, %v841
    %v843 = vand.u32 %v842, 4294901760
    %v844 = vsub.f32 %v842, %v843
    %v845 = vand.u32 %v844, 4294901760
    %846 = vmatpush.msra.mxu0 %v845
    %v847 = vand.u32 %v57, 4294901760
    %v848 = vsub.f32 %v57, %v847
    %v849 = vand.u32 %v848, 4294901760
    %v850 = vsub.f32 %v848, %v849
    %v851 = vand.u32 %v850, 4294901760
    %852 = vmatpush.msra.mxu0 %v851
    %v853 = vand.u32 %v56, 4294901760
    %v854 = vsub.f32 %v56, %v853
    %v855 = vand.u32 %v854, 4294901760
    %v856 = vsub.f32 %v854, %v855
    %v857 = vand.u32 %v856, 4294901760
    %858 = vmatpush.msra.mxu0 %v857
    %v859 = vand.u32 %v55, 4294901760
    %v860 = vsub.f32 %v55, %v859
    %v861 = vand.u32 %v860, 4294901760
    %v862 = vsub.f32 %v860, %v861
    %v863 = vand.u32 %v862, 4294901760
    %864 = vmatpush.msra.mxu0 %v863
    %v865 = vand.u32 %v54, 4294901760
    %v866 = vsub.f32 %v54, %v865
    %v867 = vand.u32 %v866, 4294901760
    %v868 = vsub.f32 %v866, %v867
    %v869 = vand.u32 %v868, 4294901760
    %870 = vmatpush.msra.mxu0 %v869
    %v871 = vand.u32 %v53, 4294901760
    %v872 = vsub.f32 %v53, %v871
    %v873 = vand.u32 %v872, 4294901760
    %v874 = vsub.f32 %v872, %v873
    %v875 = vand.u32 %v874, 4294901760
    %876 = vmatpush.msra.mxu0 %v875
    %v877 = vand.u32 %v52, 4294901760
    %v878 = vsub.f32 %v52, %v877
    %v879 = vand.u32 %v878, 4294901760
    %v880 = vsub.f32 %v878, %v879
    %v881 = vand.u32 %v880, 4294901760
    %882 = vmatpush.msra.mxu0 %v881
    %v883 = vand.u32 %v51, 4294901760
    %v884 = vsub.f32 %v51, %v883
    %v885 = vand.u32 %v884, 4294901760
    %v886 = vsub.f32 %v884, %v885
    %v887 = vand.u32 %v886, 4294901760
    %888 = vmatpush.msra.mxu0 %v887
    %v889 = vand.u32 %v50, 4294901760
    %v890 = vsub.f32 %v50, %v889
    %v891 = vand.u32 %v890, 4294901760
    %v892 = vsub.f32 %v890, %v891
    %v893 = vand.u32 %v892, 4294901760
    %894 = vmatpush.msra.mxu0 %v893
    %v895 = vand.u32 %v49, 4294901760
    %v896 = vsub.f32 %v49, %v895
    %v897 = vand.u32 %v896, 4294901760
    %v898 = vsub.f32 %v896, %v897
    %v899 = vand.u32 %v898, 4294901760
    %900 = vmatpush.msra.mxu0 %v899
    %v901 = vand.u32 %v48, 4294901760
    %v902 = vsub.f32 %v48, %v901
    %v903 = vand.u32 %v902, 4294901760
    %v904 = vsub.f32 %v902, %v903
    %v905 = vand.u32 %v904, 4294901760
    %906 = vmatpush.msra.mxu0 %v905
    %v907 = vand.u32 %v764, 4294901760
    %908 = vmatmul.f32.gmra.mxu0 %v907
    %v909 = vpop.f32.mrf.mxu0
    %v910 = vadd.f32 %v809, %v909
    %911 = vdwg.mxu0
    %v912 = vand.u32 %v63, 4294901760
    %v913 = vsub.f32 %v63, %v912
    %914 = vmatpush.msra.mxu0 %v913
    %v915 = vand.u32 %v62, 4294901760
    %v916 = vsub.f32 %v62, %v915
    %917 = vmatpush.msra.mxu0 %v916
    %v918 = vand.u32 %v61, 4294901760
    %v919 = vsub.f32 %v61, %v918
    %920 = vmatpush.msra.mxu0 %v919
    %v921 = vand.u32 %v60, 4294901760
    %v922 = vsub.f32 %v60, %v921
    %923 = vmatpush.msra.mxu0 %v922
    %v924 = vand.u32 %v59, 4294901760
    %v925 = vsub.f32 %v59, %v924
    %926 = vmatpush.msra.mxu0 %v925
    %v927 = vand.u32 %v58, 4294901760
    %v928 = vsub.f32 %v58, %v927
    %929 = vmatpush.msra.mxu0 %v928
    %v930 = vand.u32 %v57, 4294901760
    %v931 = vsub.f32 %v57, %v930
    %932 = vmatpush.msra.mxu0 %v931
    %v933 = vand.u32 %v56, 4294901760
    %v934 = vsub.f32 %v56, %v933
    %935 = vmatpush.msra.mxu0 %v934
    %v936 = vand.u32 %v55, 4294901760
    %v937 = vsub.f32 %v55, %v936
    %938 = vmatpush.msra.mxu0 %v937
    %v939 = vand.u32 %v54, 4294901760
    %v940 = vsub.f32 %v54, %v939
    %941 = vmatpush.msra.mxu0 %v940
    %v942 = vand.u32 %v53, 4294901760
    %v943 = vsub.f32 %v53, %v942
    %944 = vmatpush.msra.mxu0 %v943
    %v945 = vand.u32 %v52, 4294901760
    %v946 = vsub.f32 %v52, %v945
    %947 = vmatpush.msra.mxu0 %v946
    %v948 = vand.u32 %v51, 4294901760
    %v949 = vsub.f32 %v51, %v948
    %950 = vmatpush.msra.mxu0 %v949
    %v951 = vand.u32 %v50, 4294901760
    %v952 = vsub.f32 %v50, %v951
    %953 = vmatpush.msra.mxu0 %v952
    %v954 = vand.u32 %v49, 4294901760
    %v955 = vsub.f32 %v49, %v954
    %956 = vmatpush.msra.mxu0 %v955
    %v957 = vand.u32 %v48, 4294901760
    %v958 = vsub.f32 %v48, %v957
    %959 = vmatpush.msra.mxu0 %v958
    %v960 = vand.u32 %v764, 4294901760
    %v961 = vsub.f32 %v764, %v960
    %962 = vmatmul.f32.gmra.mxu0 %v961
    %v963 = vpop.f32.mrf.mxu0
    %v964 = vadd.f32 %v910, %v963
    %965 = vdwg.mxu0
    %v966 = vand.u32 %v63, 4294901760
    %967 = vmatpush.msra.mxu0 %v966
    %v968 = vand.u32 %v62, 4294901760
    %969 = vmatpush.msra.mxu0 %v968
    %v970 = vand.u32 %v61, 4294901760
    %971 = vmatpush.msra.mxu0 %v970
    %v972 = vand.u32 %v60, 4294901760
    %973 = vmatpush.msra.mxu0 %v972
    %v974 = vand.u32 %v59, 4294901760
    %975 = vmatpush.msra.mxu0 %v974
    %v976 = vand.u32 %v58, 4294901760
    %977 = vmatpush.msra.mxu0 %v976
    %v978 = vand.u32 %v57, 4294901760
    %979 = vmatpush.msra.mxu0 %v978
    %v980 = vand.u32 %v56, 4294901760
    %981 = vmatpush.msra.mxu0 %v980
    %v982 = vand.u32 %v55, 4294901760
    %983 = vmatpush.msra.mxu0 %v982
    %v984 = vand.u32 %v54, 4294901760
    %985 = vmatpush.msra.mxu0 %v984
    %v986 = vand.u32 %v53, 4294901760
    %987 = vmatpush.msra.mxu0 %v986
    %v988 = vand.u32 %v52, 4294901760
    %989 = vmatpush.msra.mxu0 %v988
    %v990 = vand.u32 %v51, 4294901760
    %991 = vmatpush.msra.mxu0 %v990
    %v992 = vand.u32 %v50, 4294901760
    %993 = vmatpush.msra.mxu0 %v992
    %v994 = vand.u32 %v49, 4294901760
    %995 = vmatpush.msra.mxu0 %v994
    %v996 = vand.u32 %v48, 4294901760
    %997 = vmatpush.msra.mxu0 %v996
    %v998 = vand.u32 %v764, 4294901760
    %v999 = vsub.f32 %v764, %v998
    %v1000 = vand.u32 %v999, 4294901760
    %1001 = vmatmul.f32.gmra.mxu0 %v1000
    %v1002 = vpop.f32.mrf.mxu0
    %v1003 = vadd.f32 %v964, %v1002
    %1004 = vdwg.mxu0
    %v1005 = vand.u32 %v63, 4294901760
    %v1006 = vsub.f32 %v63, %v1005
    %v1007 = vand.u32 %v1006, 4294901760
    %1008 = vmatpush.msra.mxu0 %v1007
    %v1009 = vand.u32 %v62, 4294901760
    %v1010 = vsub.f32 %v62, %v1009
    %v1011 = vand.u32 %v1010, 4294901760
    %1012 = vmatpush.msra.mxu0 %v1011
    %v1013 = vand.u32 %v61, 4294901760
    %v1014 = vsub.f32 %v61, %v1013
    %v1015 = vand.u32 %v1014, 4294901760
    %1016 = vmatpush.msra.mxu0 %v1015
    %v1017 = vand.u32 %v60, 4294901760
    %v1018 = vsub.f32 %v60, %v1017
    %v1019 = vand.u32 %v1018, 4294901760
    %1020 = vmatpush.msra.mxu0 %v1019
    %v1021 = vand.u32 %v59, 4294901760
    %v1022 = vsub.f32 %v59, %v1021
    %v1023 = vand.u32 %v1022, 4294901760
    %1024 = vmatpush.msra.mxu0 %v1023
    %v1025 = vand.u32 %v58, 4294901760
    %v1026 = vsub.f32 %v58, %v1025
    %v1027 = vand.u32 %v1026, 4294901760
    %1028 = vmatpush.msra.mxu0 %v1027
    %v1029 = vand.u32 %v57, 4294901760
    %v1030 = vsub.f32 %v57, %v1029
    %v1031 = vand.u32 %v1030, 4294901760
    %1032 = vmatpush.msra.mxu0 %v1031
    %v1033 = vand.u32 %v56, 4294901760
    %v1034 = vsub.f32 %v56, %v1033
    %v1035 = vand.u32 %v1034, 4294901760
    %1036 = vmatpush.msra.mxu0 %v1035
    %v1037 = vand.u32 %v55, 4294901760
    %v1038 = vsub.f32 %v55, %v1037
    %v1039 = vand.u32 %v1038, 4294901760
    %1040 = vmatpush.msra.mxu0 %v1039
    %v1041 = vand.u32 %v54, 4294901760
    %v1042 = vsub.f32 %v54, %v1041
    %v1043 = vand.u32 %v1042, 4294901760
    %1044 = vmatpush.msra.mxu0 %v1043
    %v1045 = vand.u32 %v53, 4294901760
    %v1046 = vsub.f32 %v53, %v1045
    %v1047 = vand.u32 %v1046, 4294901760
    %1048 = vmatpush.msra.mxu0 %v1047
    %v1049 = vand.u32 %v52, 4294901760
    %v1050 = vsub.f32 %v52, %v1049
    %v1051 = vand.u32 %v1050, 4294901760
    %1052 = vmatpush.msra.mxu0 %v1051
    %v1053 = vand.u32 %v51, 4294901760
    %v1054 = vsub.f32 %v51, %v1053
    %v1055 = vand.u32 %v1054, 4294901760
    %1056 = vmatpush.msra.mxu0 %v1055
    %v1057 = vand.u32 %v50, 4294901760
    %v1058 = vsub.f32 %v50, %v1057
    %v1059 = vand.u32 %v1058, 4294901760
    %1060 = vmatpush.msra.mxu0 %v1059
    %v1061 = vand.u32 %v49, 4294901760
    %v1062 = vsub.f32 %v49, %v1061
    %v1063 = vand.u32 %v1062, 4294901760
    %1064 = vmatpush.msra.mxu0 %v1063
    %v1065 = vand.u32 %v48, 4294901760
    %v1066 = vsub.f32 %v48, %v1065
    %v1067 = vand.u32 %v1066, 4294901760
    %1068 = vmatpush.msra.mxu0 %v1067
    %v1069 = vand.u32 %v764, 4294901760
    %1070 = vmatmul.f32.gmra.mxu0 %v1069
    %v1071 = vpop.f32.mrf.mxu0
    %v1072 = vadd.f32 %v1003, %v1071
    %1073 = vdwg.mxu0
    %v1074 = vand.u32 %v63, 4294901760
    %1075 = vmatpush.msra.mxu0 %v1074
    %v1076 = vand.u32 %v62, 4294901760
    %1077 = vmatpush.msra.mxu0 %v1076
    %v1078 = vand.u32 %v61, 4294901760
    %1079 = vmatpush.msra.mxu0 %v1078
    %v1080 = vand.u32 %v60, 4294901760
    %1081 = vmatpush.msra.mxu0 %v1080
    %v1082 = vand.u32 %v59, 4294901760
    %1083 = vmatpush.msra.mxu0 %v1082
    %v1084 = vand.u32 %v58, 4294901760
    %1085 = vmatpush.msra.mxu0 %v1084
    %v1086 = vand.u32 %v57, 4294901760
    %1087 = vmatpush.msra.mxu0 %v1086
    %v1088 = vand.u32 %v56, 4294901760
    %1089 = vmatpush.msra.mxu0 %v1088
    %v1090 = vand.u32 %v55, 4294901760
    %1091 = vmatpush.msra.mxu0 %v1090
    %v1092 = vand.u32 %v54, 4294901760
    %1093 = vmatpush.msra.mxu0 %v1092
    %v1094 = vand.u32 %v53, 4294901760
    %1095 = vmatpush.msra.mxu0 %v1094
    %v1096 = vand.u32 %v52, 4294901760
    %1097 = vmatpush.msra.mxu0 %v1096
    %v1098 = vand.u32 %v51, 4294901760
    %1099 = vmatpush.msra.mxu0 %v1098
    %v1100 = vand.u32 %v50, 4294901760
    %1101 = vmatpush.msra.mxu0 %v1100
    %v1102 = vand.u32 %v49, 4294901760
    %1103 = vmatpush.msra.mxu0 %v1102
    %v1104 = vand.u32 %v48, 4294901760
    %1105 = vmatpush.msra.mxu0 %v1104
    %v1106 = vand.u32 %v764, 4294901760
    %1107 = vmatmul.f32.gmra.mxu0 %v1106
    %v1108 = vpop.f32.mrf.mxu0
    %v1109 = vadd.f32 %v1072, %v1108
    %1110 = vdwg.mxu0
    %v1111 = vtanh.pop %v1109
    %v1112 = vmul.f32 %v1111, 0.001
    %v1113 = vadd.f32 %v761, %v1112
    %v1114 = vmul.f32 %v1113, 0.5
    %v1115 = vadd.f32 %v1114, 1.0
    %v1116 = vmul.f32 %v1115, %v1111
    %s1117 = scalar_lea.vmem [#allocation9], %s767
    %1118 = vst [vmem:[%s1117] sm:$0x1] %v1116
    %s1119 = sadd.s32 0, 3
    %s1120 = scalar_lea.vmem [#allocation4], %s1119
    %v1121 = vld [vmem:[%s1120] sm:$0x1]
    %v1122 = vand.u32 %v63, 4294901760
    %1123 = vmatpush.msra.mxu0 %v1122
    %v1124 = vand.u32 %v62, 4294901760
    %1125 = vmatpush.msra.mxu0 %v1124
    %v1126 = vand.u32 %v61, 4294901760
    %1127 = vmatpush.msra.mxu0 %v1126
    %v1128 = vand.u32 %v60, 4294901760
    %1129 = vmatpush.msra.mxu0 %v1128
    %v1130 = vand.u32 %v59, 4294901760
    %1131 = vmatpush.msra.mxu0 %v1130
    %v1132 = vand.u32 %v58, 4294901760
    %1133 = vmatpush.msra.mxu0 %v1132
    %v1134 = vand.u32 %v57, 4294901760
    %1135 = vmatpush.msra.mxu0 %v1134
    %v1136 = vand.u32 %v56, 4294901760
    %1137 = vmatpush.msra.mxu0 %v1136
    %v1138 = vand.u32 %v55, 4294901760
    %1139 = vmatpush.msra.mxu0 %v1138
    %v1140 = vand.u32 %v54, 4294901760
    %1141 = vmatpush.msra.mxu0 %v1140
    %v1142 = vand.u32 %v53, 4294901760
    %1143 = vmatpush.msra.mxu0 %v1142
    %v1144 = vand.u32 %v52, 4294901760
    %1145 = vmatpush.msra.mxu0 %v1144
    %v1146 = vand.u32 %v51, 4294901760
    %1147 = vmatpush.msra.mxu0 %v1146
    %v1148 = vand.u32 %v50, 4294901760
    %1149 = vmatpush.msra.mxu0 %v1148
    %v1150 = vand.u32 %v49, 4294901760
    %1151 = vmatpush.msra.mxu0 %v1150
    %v1152 = vand.u32 %v48, 4294901760
    %1153 = vmatpush.msra.mxu0 %v1152
    %v1154 = vand.u32 %v1116, 4294901760
    %v1155 = vsub.f32 %v1116, %v1154
    %v1156 = vand.u32 %v1155, 4294901760
    %v1157 = vsub.f32 %v1155, %v1156
    %v1158 = vand.u32 %v1157, 4294901760
    %1159 = vmatmul.f32.gmra.mxu0 %v1158
    %v1160 = vpop.f32.mrf.mxu0
    %v1161 = vadd.f32 %v1121, %v1160
    %1162 = vdwg.mxu0
    %v1163 = vand.u32 %v63, 4294901760
    %v1164 = vsub.f32 %v63, %v1163
    %v1165 = vand.u32 %v1164, 4294901760
    %v1166 = vsub.f32 %v1164, %v1165
    %v1167 = vand.u32 %v1166, 4294901760
    %1168 = vmatpush.msra.mxu0 %v1167
    %v1169 = vand.u32 %v62, 4294901760
    %v1170 = vsub.f32 %v62, %v1169
    %v1171 = vand.u32 %v1170, 4294901760
    %v1172 = vsub.f32 %v1170, %v1171
    %v1173 = vand.u32 %v1172, 4294901760
    %1174 = vmatpush.msra.mxu0 %v1173
    %v1175 = vand.u32 %v61, 4294901760
    %v1176 = vsub.f32 %v61, %v1175
    %v1177 = vand.u32 %v1176, 4294901760
    %v1178 = vsub.f32 %v1176, %v1177
    %v1179 = vand.u32 %v1178, 4294901760
    %1180 = vmatpush.msra.mxu0 %v1179
    %v1181 = vand.u32 %v60, 4294901760
    %v1182 = vsub.f32 %v60, %v1181
    %v1183 = vand.u32 %v1182, 4294901760
    %v1184 = vsub.f32 %v1182, %v1183
    %v1185 = vand.u32 %v1184, 4294901760
    %1186 = vmatpush.msra.mxu0 %v1185
    %v1187 = vand.u32 %v59, 4294901760
    %v1188 = vsub.f32 %v59, %v1187
    %v1189 = vand.u32 %v1188, 4294901760
    %v1190 = vsub.f32 %v1188, %v1189
    %v1191 = vand.u32 %v1190, 4294901760
    %1192 = vmatpush.msra.mxu0 %v1191
    %v1193 = vand.u32 %v58, 4294901760
    %v1194 = vsub.f32 %v58, %v1193
    %v1195 = vand.u32 %v1194, 4294901760
    %v1196 = vsub.f32 %v1194, %v1195
    %v1197 = vand.u32 %v1196, 4294901760
    %1198 = vmatpush.msra.mxu0 %v1197
    %v1199 = vand.u32 %v57, 4294901760
    %v1200 = vsub.f32 %v57, %v1199
    %v1201 = vand.u32 %v1200, 4294901760
    %v1202 = vsub.f32 %v1200, %v1201
    %v1203 = vand.u32 %v1202, 4294901760
    %1204 = vmatpush.msra.mxu0 %v1203
    %v1205 = vand.u32 %v56, 4294901760
    %v1206 = vsub.f32 %v56, %v1205
    %v1207 = vand.u32 %v1206, 4294901760
    %v1208 = vsub.f32 %v1206, %v1207
    %v1209 = vand.u32 %v1208, 4294901760
    %1210 = vmatpush.msra.mxu0 %v1209
    %v1211 = vand.u32 %v55, 4294901760
    %v1212 = vsub.f32 %v55, %v1211
    %v1213 = vand.u32 %v1212, 4294901760
    %v1214 = vsub.f32 %v1212, %v1213
    %v1215 = vand.u32 %v1214, 4294901760
    %1216 = vmatpush.msra.mxu0 %v1215
    %v1217 = vand.u32 %v54, 4294901760
    %v1218 = vsub.f32 %v54, %v1217
    %v1219 = vand.u32 %v1218, 4294901760
    %v1220 = vsub.f32 %v1218, %v1219
    %v1221 = vand.u32 %v1220, 4294901760
    %1222 = vmatpush.msra.mxu0 %v1221
    %v1223 = vand.u32 %v53, 4294901760
    %v1224 = vsub.f32 %v53, %v1223
    %v1225 = vand.u32 %v1224, 4294901760
    %v1226 = vsub.f32 %v1224, %v1225
    %v1227 = vand.u32 %v1226, 4294901760
    %1228 = vmatpush.msra.mxu0 %v1227
    %v1229 = vand.u32 %v52, 4294901760
    %v1230 = vsub.f32 %v52, %v1229
    %v1231 = vand.u32 %v1230, 4294901760
    %v1232 = vsub.f32 %v1230, %v1231
    %v1233 = vand.u32 %v1232, 4294901760
    %1234 = vmatpush.msra.mxu0 %v1233
    %v1235 = vand.u32 %v51, 4294901760
    %v1236 = vsub.f32 %v51, %v1235
    %v1237 = vand.u32 %v1236, 4294901760
    %v1238 = vsub.f32 %v1236, %v1237
    %v1239 = vand.u32 %v1238, 4294901760
    %1240 = vmatpush.msra.mxu0 %v1239
    %v1241 = vand.u32 %v50, 4294901760
    %v1242 = vsub.f32 %v50, %v1241
    %v1243 = vand.u32 %v1242, 4294901760
    %v1244 = vsub.f32 %v1242, %v1243
    %v1245 = vand.u32 %v1244, 4294901760
    %1246 = vmatpush.msra.mxu0 %v1245
    %v1247 = vand.u32 %v49, 4294901760
    %v1248 = vsub.f32 %v49, %v1247
    %v1249 = vand.u32 %v1248, 4294901760
    %v1250 = vsub.f32 %v1248, %v1249
    %v1251 = vand.u32 %v1250, 4294901760
    %1252 = vmatpush.msra.mxu0 %v1251
    %v1253 = vand.u32 %v48, 4294901760
    %v1254 = vsub.f32 %v48, %v1253
    %v1255 = vand.u32 %v1254, 4294901760
    %v1256 = vsub.f32 %v1254, %v1255
    %v1257 = vand.u32 %v1256, 4294901760
    %1258 = vmatpush.msra.mxu0 %v1257
    %v1259 = vand.u32 %v1116, 4294901760
    %1260 = vmatmul.f32.gmra.mxu0 %v1259
    %v1261 = vpop.f32.mrf.mxu0
    %v1262 = vadd.f32 %v1161, %v1261
    %1263 = vdwg.mxu0
    %v1264 = vand.u32 %v63, 4294901760
    %v1265 = vsub.f32 %v63, %v1264
    %1266 = vmatpush.msra.mxu0 %v1265
    %v1267 = vand.u32 %v62, 4294901760
    %v1268 = vsub.f32 %v62, %v1267
    %1269 = vmatpush.msra.mxu0 %v1268
    %v1270 = vand.u32 %v61, 4294901760
    %v1271 = vsub.f32 %v61, %v1270
    %1272 = vmatpush.msra.mxu0 %v1271
    %v1273 = vand.u32 %v60, 4294901760
    %v1274 = vsub.f32 %v60, %v1273
    %1275 = vmatpush.msra.mxu0 %v1274
    %v1276 = vand.u32 %v59, 4294901760
    %v1277 = vsub.f32 %v59, %v1276
    %1278 = vmatpush.msra.mxu0 %v1277
    %v1279 = vand.u32 %v58, 4294901760
    %v1280 = vsub.f32 %v58, %v1279
    %1281 = vmatpush.msra.mxu0 %v1280
    %v1282 = vand.u32 %v57, 4294901760
    %v1283 = vsub.f32 %v57, %v1282
    %1284 = vmatpush.msra.mxu0 %v1283
    %v1285 = vand.u32 %v56, 4294901760
    %v1286 = vsub.f32 %v56, %v1285
    %1287 = vmatpush.msra.mxu0 %v1286
    %v1288 = vand.u32 %v55, 4294901760
    %v1289 = vsub.f32 %v55, %v1288
    %1290 = vmatpush.msra.mxu0 %v1289
    %v1291 = vand.u32 %v54, 4294901760
    %v1292 = vsub.f32 %v54, %v1291
    %1293 = vmatpush.msra.mxu0 %v1292
    %v1294 = vand.u32 %v53, 4294901760
    %v1295 = vsub.f32 %v53, %v1294
    %1296 = vmatpush.msra.mxu0 %v1295
    %v1297 = vand.u32 %v52, 4294901760
    %v1298 = vsub.f32 %v52, %v1297
    %1299 = vmatpush.msra.mxu0 %v1298
    %v1300 = vand.u32 %v51, 4294901760
    %v1301 = vsub.f32 %v51, %v1300
    %1302 = vmatpush.msra.mxu0 %v1301
    %v1303 = vand.u32 %v50, 4294901760
    %v1304 = vsub.f32 %v50, %v1303
    %1305 = vmatpush.msra.mxu0 %v1304
    %v1306 = vand.u32 %v49, 4294901760
    %v1307 = vsub.f32 %v49, %v1306
    %1308 = vmatpush.msra.mxu0 %v1307
    %v1309 = vand.u32 %v48, 4294901760
    %v1310 = vsub.f32 %v48, %v1309
    %1311 = vmatpush.msra.mxu0 %v1310
    %v1312 = vand.u32 %v1116, 4294901760
    %v1313 = vsub.f32 %v1116, %v1312
    %1314 = vmatmul.f32.gmra.mxu0 %v1313
    %v1315 = vpop.f32.mrf.mxu0
    %v1316 = vadd.f32 %v1262, %v1315
    %1317 = vdwg.mxu0
    %v1318 = vand.u32 %v63, 4294901760
    %1319 = vmatpush.msra.mxu0 %v1318
    %v1320 = vand.u32 %v62, 4294901760
    %1321 = vmatpush.msra.mxu0 %v1320
    %v1322 = vand.u32 %v61, 4294901760
    %1323 = vmatpush.msra.mxu0 %v1322
    %v1324 = vand.u32 %v60, 4294901760
    %1325 = vmatpush.msra.mxu0 %v1324
    %v1326 = vand.u32 %v59, 4294901760
    %1327 = vmatpush.msra.mxu0 %v1326
    %v1328 = vand.u32 %v58, 4294901760
    %1329 = vmatpush.msra.mxu0 %v1328
    %v1330 = vand.u32 %v57, 4294901760
    %1331 = vmatpush.msra.mxu0 %v1330
    %v1332 = vand.u32 %v56, 4294901760
    %1333 = vmatpush.msra.mxu0 %v1332
    %v1334 = vand.u32 %v55, 4294901760
    %1335 = vmatpush.msra.mxu0 %v1334
    %v1336 = vand.u32 %v54, 4294901760
    %1337 = vmatpush.msra.mxu0 %v1336
    %v1338 = vand.u32 %v53, 4294901760
    %1339 = vmatpush.msra.mxu0 %v1338
    %v1340 = vand.u32 %v52, 4294901760
    %1341 = vmatpush.msra.mxu0 %v1340
    %v1342 = vand.u32 %v51, 4294901760
    %1343 = vmatpush.msra.mxu0 %v1342
    %v1344 = vand.u32 %v50, 4294901760
    %1345 = vmatpush.msra.mxu0 %v1344
    %v1346 = vand.u32 %v49, 4294901760
    %1347 = vmatpush.msra.mxu0 %v1346
    %v1348 = vand.u32 %v48, 4294901760
    %1349 = vmatpush.msra.mxu0 %v1348
    %v1350 = vand.u32 %v1116, 4294901760
    %v1351 = vsub.f32 %v1116, %v1350
    %v1352 = vand.u32 %v1351, 4294901760
    %1353 = vmatmul.f32.gmra.mxu0 %v1352
    %v1354 = vpop.f32.mrf.mxu0
    %v1355 = vadd.f32 %v1316, %v1354
    %1356 = vdwg.mxu0
    %v1357 = vand.u32 %v63, 4294901760
    %v1358 = vsub.f32 %v63, %v1357
    %v1359 = vand.u32 %v1358, 4294901760
    %1360 = vmatpush.msra.mxu0 %v1359
    %v1361 = vand.u32 %v62, 4294901760
    %v1362 = vsub.f32 %v62, %v1361
    %v1363 = vand.u32 %v1362, 4294901760
    %1364 = vmatpush.msra.mxu0 %v1363
    %v1365 = vand.u32 %v61, 4294901760
    %v1366 = vsub.f32 %v61, %v1365
    %v1367 = vand.u32 %v1366, 4294901760
    %1368 = vmatpush.msra.mxu0 %v1367
    %v1369 = vand.u32 %v60, 4294901760
    %v1370 = vsub.f32 %v60, %v1369
    %v1371 = vand.u32 %v1370, 4294901760
    %1372 = vmatpush.msra.mxu0 %v1371
    %v1373 = vand.u32 %v59, 4294901760
    %v1374 = vsub.f32 %v59, %v1373
    %v1375 = vand.u32 %v1374, 4294901760
    %1376 = vmatpush.msra.mxu0 %v1375
    %v1377 = vand.u32 %v58, 4294901760
    %v1378 = vsub.f32 %v58, %v1377
    %v1379 = vand.u32 %v1378, 4294901760
    %1380 = vmatpush.msra.mxu0 %v1379
    %v1381 = vand.u32 %v57, 4294901760
    %v1382 = vsub.f32 %v57, %v1381
    %v1383 = vand.u32 %v1382, 4294901760
    %1384 = vmatpush.msra.mxu0 %v1383
    %v1385 = vand.u32 %v56, 4294901760
    %v1386 = vsub.f32 %v56, %v1385
    %v1387 = vand.u32 %v1386, 4294901760
    %1388 = vmatpush.msra.mxu0 %v1387
    %v1389 = vand.u32 %v55, 4294901760
    %v1390 = vsub.f32 %v55, %v1389
    %v1391 = vand.u32 %v1390, 4294901760
    %1392 = vmatpush.msra.mxu0 %v1391
    %v1393 = vand.u32 %v54, 4294901760
    %v1394 = vsub.f32 %v54, %v1393
    %v1395 = vand.u32 %v1394, 4294901760
    %1396 = vmatpush.msra.mxu0 %v1395
    %v1397 = vand.u32 %v53, 4294901760
    %v1398 = vsub.f32 %v53, %v1397
    %v1399 = vand.u32 %v1398, 4294901760
    %1400 = vmatpush.msra.mxu0 %v1399
    %v1401 = vand.u32 %v52, 4294901760
    %v1402 = vsub.f32 %v52, %v1401
    %v1403 = vand.u32 %v1402, 4294901760
    %1404 = vmatpush.msra.mxu0 %v1403
    %v1405 = vand.u32 %v51, 4294901760
    %v1406 = vsub.f32 %v51, %v1405
    %v1407 = vand.u32 %v1406, 4294901760
    %1408 = vmatpush.msra.mxu0 %v1407
    %v1409 = vand.u32 %v50, 4294901760
    %v1410 = vsub.f32 %v50, %v1409
    %v1411 = vand.u32 %v1410, 4294901760
    %1412 = vmatpush.msra.mxu0 %v1411
    %v1413 = vand.u32 %v49, 4294901760
    %v1414 = vsub.f32 %v49, %v1413
    %v1415 = vand.u32 %v1414, 4294901760
    %1416 = vmatpush.msra.mxu0 %v1415
    %v1417 = vand.u32 %v48, 4294901760
    %v1418 = vsub.f32 %v48, %v1417
    %v1419 = vand.u32 %v1418, 4294901760
    %1420 = vmatpush.msra.mxu0 %v1419
    %v1421 = vand.u32 %v1116, 4294901760
    %1422 = vmatmul.f32.gmra.mxu0 %v1421
    %v1423 = vpop.f32.mrf.mxu0
    %v1424 = vadd.f32 %v1355, %v1423
    %1425 = vdwg.mxu0
    %v1426 = vand.u32 %v63, 4294901760
    %1427 = vmatpush.msra.mxu0 %v1426
    %v1428 = vand.u32 %v62, 4294901760
    %1429 = vmatpush.msra.mxu0 %v1428
    %v1430 = vand.u32 %v61, 4294901760
    %1431 = vmatpush.msra.mxu0 %v1430
    %v1432 = vand.u32 %v60, 4294901760
    %1433 = vmatpush.msra.mxu0 %v1432
    %v1434 = vand.u32 %v59, 4294901760
    %1435 = vmatpush.msra.mxu0 %v1434
    %v1436 = vand.u32 %v58, 4294901760
    %1437 = vmatpush.msra.mxu0 %v1436
    %v1438 = vand.u32 %v57, 4294901760
    %1439 = vmatpush.msra.mxu0 %v1438
    %v1440 = vand.u32 %v56, 4294901760
    %1441 = vmatpush.msra.mxu0 %v1440
    %v1442 = vand.u32 %v55, 4294901760
    %1443 = vmatpush.msra.mxu0 %v1442
    %v1444 = vand.u32 %v54, 4294901760
    %1445 = vmatpush.msra.mxu0 %v1444
    %v1446 = vand.u32 %v53, 4294901760
    %1447 = vmatpush.msra.mxu0 %v1446
    %v1448 = vand.u32 %v52, 4294901760
    %1449 = vmatpush.msra.mxu0 %v1448
    %v1450 = vand.u32 %v51, 4294901760
    %1451 = vmatpush.msra.mxu0 %v1450
    %v1452 = vand.u32 %v50, 4294901760
    %1453 = vmatpush.msra.mxu0 %v1452
    %v1454 = vand.u32 %v49, 4294901760
    %1455 = vmatpush.msra.mxu0 %v1454
    %v1456 = vand.u32 %v48, 4294901760
    %1457 = vmatpush.msra.mxu0 %v1456
    %v1458 = vand.u32 %v1116, 4294901760
    %1459 = vmatmul.f32.gmra.mxu0 %v1458
    %v1460 = vpop.f32.mrf.mxu0
    %v1461 = vadd.f32 %v1424, %v1460
    %1462 = vdwg.mxu0
    %v1463 = vtanh.pop %v1461
    %v1464 = vmul.f32 %v1463, 0.001
    %v1465 = vadd.f32 %v1113, %v1464
    %v1466 = vmul.f32 %v1465, 0.5
    %v1467 = vadd.f32 %v1466, 1.0
    %v1468 = vmul.f32 %v1467, %v1463
    %s1469 = scalar_lea.vmem [#allocation9], %s1119
    %1470 = vst [vmem:[%s1469] sm:$0x1] %v1468
    %s1471 = sadd.s32 0, 4
    %s1472 = scalar_lea.vmem [#allocation4], %s1471
    %v1473 = vld [vmem:[%s1472] sm:$0x1]
    %v1474 = vand.u32 %v63, 4294901760
    %1475 = vmatpush.msra.mxu0 %v1474
    %v1476 = vand.u32 %v62, 4294901760
    %1477 = vmatpush.msra.mxu0 %v1476
    %v1478 = vand.u32 %v61, 4294901760
    %1479 = vmatpush.msra.mxu0 %v1478
    %v1480 = vand.u32 %v60, 4294901760
    %1481 = vmatpush.msra.mxu0 %v1480
    %v1482 = vand.u32 %v59, 4294901760
    %1483 = vmatpush.msra.mxu0 %v1482
    %v1484 = vand.u32 %v58, 4294901760
    %1485 = vmatpush.msra.mxu0 %v1484
    %v1486 = vand.u32 %v57, 4294901760
    %1487 = vmatpush.msra.mxu0 %v1486
    %v1488 = vand.u32 %v56, 4294901760
    %1489 = vmatpush.msra.mxu0 %v1488
    %v1490 = vand.u32 %v55, 4294901760
    %1491 = vmatpush.msra.mxu0 %v1490
    %v1492 = vand.u32 %v54, 4294901760
    %1493 = vmatpush.msra.mxu0 %v1492
    %v1494 = vand.u32 %v53, 4294901760
    %1495 = vmatpush.msra.mxu0 %v1494
    %v1496 = vand.u32 %v52, 4294901760
    %1497 = vmatpush.msra.mxu0 %v1496
    %v1498 = vand.u32 %v51, 4294901760
    %1499 = vmatpush.msra.mxu0 %v1498
    %v1500 = vand.u32 %v50, 4294901760
    %1501 = vmatpush.msra.mxu0 %v1500
    %v1502 = vand.u32 %v49, 4294901760
    %1503 = vmatpush.msra.mxu0 %v1502
    %v1504 = vand.u32 %v48, 4294901760
    %1505 = vmatpush.msra.mxu0 %v1504
    %v1506 = vand.u32 %v1468, 4294901760
    %v1507 = vsub.f32 %v1468, %v1506
    %v1508 = vand.u32 %v1507, 4294901760
    %v1509 = vsub.f32 %v1507, %v1508
    %v1510 = vand.u32 %v1509, 4294901760
    %1511 = vmatmul.f32.gmra.mxu0 %v1510
    %v1512 = vpop.f32.mrf.mxu0
    %v1513 = vadd.f32 %v1473, %v1512
    %1514 = vdwg.mxu0
    %v1515 = vand.u32 %v63, 4294901760
    %v1516 = vsub.f32 %v63, %v1515
    %v1517 = vand.u32 %v1516, 4294901760
    %v1518 = vsub.f32 %v1516, %v1517
    %v1519 = vand.u32 %v1518, 4294901760
    %1520 = vmatpush.msra.mxu0 %v1519
    %v1521 = vand.u32 %v62, 4294901760
    %v1522 = vsub.f32 %v62, %v1521
    %v1523 = vand.u32 %v1522, 4294901760
    %v1524 = vsub.f32 %v1522, %v1523
    %v1525 = vand.u32 %v1524, 4294901760
    %1526 = vmatpush.msra.mxu0 %v1525
    %v1527 = vand.u32 %v61, 4294901760
    %v1528 = vsub.f32 %v61, %v1527
    %v1529 = vand.u32 %v1528, 4294901760
    %v1530 = vsub.f32 %v1528, %v1529
    %v1531 = vand.u32 %v1530, 4294901760
    %1532 = vmatpush.msra.mxu0 %v1531
    %v1533 = vand.u32 %v60, 4294901760
    %v1534 = vsub.f32 %v60, %v1533
    %v1535 = vand.u32 %v1534, 4294901760
    %v1536 = vsub.f32 %v1534, %v1535
    %v1537 = vand.u32 %v1536, 4294901760
    %1538 = vmatpush.msra.mxu0 %v1537
    %v1539 = vand.u32 %v59, 4294901760
    %v1540 = vsub.f32 %v59, %v1539
    %v1541 = vand.u32 %v1540, 4294901760
    %v1542 = vsub.f32 %v1540, %v1541
    %v1543 = vand.u32 %v1542, 4294901760
    %1544 = vmatpush.msra.mxu0 %v1543
    %v1545 = vand.u32 %v58, 4294901760
    %v1546 = vsub.f32 %v58, %v1545
    %v1547 = vand.u32 %v1546, 4294901760
    %v1548 = vsub.f32 %v1546, %v1547
    %v1549 = vand.u32 %v1548, 4294901760
    %1550 = vmatpush.msra.mxu0 %v1549
    %v1551 = vand.u32 %v57, 4294901760
    %v1552 = vsub.f32 %v57, %v1551
    %v1553 = vand.u32 %v1552, 4294901760
    %v1554 = vsub.f32 %v1552, %v1553
    %v1555 = vand.u32 %v1554, 4294901760
    %1556 = vmatpush.msra.mxu0 %v1555
    %v1557 = vand.u32 %v56, 4294901760
    %v1558 = vsub.f32 %v56, %v1557
    %v1559 = vand.u32 %v1558, 4294901760
    %v1560 = vsub.f32 %v1558, %v1559
    %v1561 = vand.u32 %v1560, 4294901760
    %1562 = vmatpush.msra.mxu0 %v1561
    %v1563 = vand.u32 %v55, 4294901760
    %v1564 = vsub.f32 %v55, %v1563
    %v1565 = vand.u32 %v1564, 4294901760
    %v1566 = vsub.f32 %v1564, %v1565
    %v1567 = vand.u32 %v1566, 4294901760
    %1568 = vmatpush.msra.mxu0 %v1567
    %v1569 = vand.u32 %v54, 4294901760
    %v1570 = vsub.f32 %v54, %v1569
    %v1571 = vand.u32 %v1570, 4294901760
    %v1572 = vsub.f32 %v1570, %v1571
    %v1573 = vand.u32 %v1572, 4294901760
    %1574 = vmatpush.msra.mxu0 %v1573
    %v1575 = vand.u32 %v53, 4294901760
    %v1576 = vsub.f32 %v53, %v1575
    %v1577 = vand.u32 %v1576, 4294901760
    %v1578 = vsub.f32 %v1576, %v1577
    %v1579 = vand.u32 %v1578, 4294901760
    %1580 = vmatpush.msra.mxu0 %v1579
    %v1581 = vand.u32 %v52, 4294901760
    %v1582 = vsub.f32 %v52, %v1581
    %v1583 = vand.u32 %v1582, 4294901760
    %v1584 = vsub.f32 %v1582, %v1583
    %v1585 = vand.u32 %v1584, 4294901760
    %1586 = vmatpush.msra.mxu0 %v1585
    %v1587 = vand.u32 %v51, 4294901760
    %v1588 = vsub.f32 %v51, %v1587
    %v1589 = vand.u32 %v1588, 4294901760
    %v1590 = vsub.f32 %v1588, %v1589
    %v1591 = vand.u32 %v1590, 4294901760
    %1592 = vmatpush.msra.mxu0 %v1591
    %v1593 = vand.u32 %v50, 4294901760
    %v1594 = vsub.f32 %v50, %v1593
    %v1595 = vand.u32 %v1594, 4294901760
    %v1596 = vsub.f32 %v1594, %v1595
    %v1597 = vand.u32 %v1596, 4294901760
    %1598 = vmatpush.msra.mxu0 %v1597
    %v1599 = vand.u32 %v49, 4294901760
    %v1600 = vsub.f32 %v49, %v1599
    %v1601 = vand.u32 %v1600, 4294901760
    %v1602 = vsub.f32 %v1600, %v1601
    %v1603 = vand.u32 %v1602, 4294901760
    %1604 = vmatpush.msra.mxu0 %v1603
    %v1605 = vand.u32 %v48, 4294901760
    %v1606 = vsub.f32 %v48, %v1605
    %v1607 = vand.u32 %v1606, 4294901760
    %v1608 = vsub.f32 %v1606, %v1607
    %v1609 = vand.u32 %v1608, 4294901760
    %1610 = vmatpush.msra.mxu0 %v1609
    %v1611 = vand.u32 %v1468, 4294901760
    %1612 = vmatmul.f32.gmra.mxu0 %v1611
    %v1613 = vpop.f32.mrf.mxu0
    %v1614 = vadd.f32 %v1513, %v1613
    %1615 = vdwg.mxu0
    %v1616 = vand.u32 %v63, 4294901760
    %v1617 = vsub.f32 %v63, %v1616
    %1618 = vmatpush.msra.mxu0 %v1617
    %v1619 = vand.u32 %v62, 4294901760
    %v1620 = vsub.f32 %v62, %v1619
    %1621 = vmatpush.msra.mxu0 %v1620
    %v1622 = vand.u32 %v61, 4294901760
    %v1623 = vsub.f32 %v61, %v1622
    %1624 = vmatpush.msra.mxu0 %v1623
    %v1625 = vand.u32 %v60, 4294901760
    %v1626 = vsub.f32 %v60, %v1625
    %1627 = vmatpush.msra.mxu0 %v1626
    %v1628 = vand.u32 %v59, 4294901760
    %v1629 = vsub.f32 %v59, %v1628
    %1630 = vmatpush.msra.mxu0 %v1629
    %v1631 = vand.u32 %v58, 4294901760
    %v1632 = vsub.f32 %v58, %v1631
    %1633 = vmatpush.msra.mxu0 %v1632
    %v1634 = vand.u32 %v57, 4294901760
    %v1635 = vsub.f32 %v57, %v1634
    %1636 = vmatpush.msra.mxu0 %v1635
    %v1637 = vand.u32 %v56, 4294901760
    %v1638 = vsub.f32 %v56, %v1637
    %1639 = vmatpush.msra.mxu0 %v1638
    %v1640 = vand.u32 %v55, 4294901760
    %v1641 = vsub.f32 %v55, %v1640
    %1642 = vmatpush.msra.mxu0 %v1641
    %v1643 = vand.u32 %v54, 4294901760
    %v1644 = vsub.f32 %v54, %v1643
    %1645 = vmatpush.msra.mxu0 %v1644
    %v1646 = vand.u32 %v53, 4294901760
    %v1647 = vsub.f32 %v53, %v1646
    %1648 = vmatpush.msra.mxu0 %v1647
    %v1649 = vand.u32 %v52, 4294901760
    %v1650 = vsub.f32 %v52, %v1649
    %1651 = vmatpush.msra.mxu0 %v1650
    %v1652 = vand.u32 %v51, 4294901760
    %v1653 = vsub.f32 %v51, %v1652
    %1654 = vmatpush.msra.mxu0 %v1653
    %v1655 = vand.u32 %v50, 4294901760
    %v1656 = vsub.f32 %v50, %v1655
    %1657 = vmatpush.msra.mxu0 %v1656
    %v1658 = vand.u32 %v49, 4294901760
    %v1659 = vsub.f32 %v49, %v1658
    %1660 = vmatpush.msra.mxu0 %v1659
    %v1661 = vand.u32 %v48, 4294901760
    %v1662 = vsub.f32 %v48, %v1661
    %1663 = vmatpush.msra.mxu0 %v1662
    %v1664 = vand.u32 %v1468, 4294901760
    %v1665 = vsub.f32 %v1468, %v1664
    %1666 = vmatmul.f32.gmra.mxu0 %v1665
    %v1667 = vpop.f32.mrf.mxu0
    %v1668 = vadd.f32 %v1614, %v1667
    %1669 = vdwg.mxu0
    %v1670 = vand.u32 %v63, 4294901760
    %1671 = vmatpush.msra.mxu0 %v1670
    %v1672 = vand.u32 %v62, 4294901760
    %1673 = vmatpush.msra.mxu0 %v1672
    %v1674 = vand.u32 %v61, 4294901760
    %1675 = vmatpush.msra.mxu0 %v1674
    %v1676 = vand.u32 %v60, 4294901760
    %1677 = vmatpush.msra.mxu0 %v1676
    %v1678 = vand.u32 %v59, 4294901760
    %1679 = vmatpush.msra.mxu0 %v1678
    %v1680 = vand.u32 %v58, 4294901760
    %1681 = vmatpush.msra.mxu0 %v1680
    %v1682 = vand.u32 %v57, 4294901760
    %1683 = vmatpush.msra.mxu0 %v1682
    %v1684 = vand.u32 %v56, 4294901760
    %1685 = vmatpush.msra.mxu0 %v1684
    %v1686 = vand.u32 %v55, 4294901760
    %1687 = vmatpush.msra.mxu0 %v1686
    %v1688 = vand.u32 %v54, 4294901760
    %1689 = vmatpush.msra.mxu0 %v1688
    %v1690 = vand.u32 %v53, 4294901760
    %1691 = vmatpush.msra.mxu0 %v1690
    %v1692 = vand.u32 %v52, 4294901760
    %1693 = vmatpush.msra.mxu0 %v1692
    %v1694 = vand.u32 %v51, 4294901760
    %1695 = vmatpush.msra.mxu0 %v1694
    %v1696 = vand.u32 %v50, 4294901760
    %1697 = vmatpush.msra.mxu0 %v1696
    %v1698 = vand.u32 %v49, 4294901760
    %1699 = vmatpush.msra.mxu0 %v1698
    %v1700 = vand.u32 %v48, 4294901760
    %1701 = vmatpush.msra.mxu0 %v1700
    %v1702 = vand.u32 %v1468, 4294901760
    %v1703 = vsub.f32 %v1468, %v1702
    %v1704 = vand.u32 %v1703, 4294901760
    %1705 = vmatmul.f32.gmra.mxu0 %v1704
    %v1706 = vpop.f32.mrf.mxu0
    %v1707 = vadd.f32 %v1668, %v1706
    %1708 = vdwg.mxu0
    %v1709 = vand.u32 %v63, 4294901760
    %v1710 = vsub.f32 %v63, %v1709
    %v1711 = vand.u32 %v1710, 4294901760
    %1712 = vmatpush.msra.mxu0 %v1711
    %v1713 = vand.u32 %v62, 4294901760
    %v1714 = vsub.f32 %v62, %v1713
    %v1715 = vand.u32 %v1714, 4294901760
    %1716 = vmatpush.msra.mxu0 %v1715
    %v1717 = vand.u32 %v61, 4294901760
    %v1718 = vsub.f32 %v61, %v1717
    %v1719 = vand.u32 %v1718, 4294901760
    %1720 = vmatpush.msra.mxu0 %v1719
    %v1721 = vand.u32 %v60, 4294901760
    %v1722 = vsub.f32 %v60, %v1721
    %v1723 = vand.u32 %v1722, 4294901760
    %1724 = vmatpush.msra.mxu0 %v1723
    %v1725 = vand.u32 %v59, 4294901760
    %v1726 = vsub.f32 %v59, %v1725
    %v1727 = vand.u32 %v1726, 4294901760
    %1728 = vmatpush.msra.mxu0 %v1727
    %v1729 = vand.u32 %v58, 4294901760
    %v1730 = vsub.f32 %v58, %v1729
    %v1731 = vand.u32 %v1730, 4294901760
    %1732 = vmatpush.msra.mxu0 %v1731
    %v1733 = vand.u32 %v57, 4294901760
    %v1734 = vsub.f32 %v57, %v1733
    %v1735 = vand.u32 %v1734, 4294901760
    %1736 = vmatpush.msra.mxu0 %v1735
    %v1737 = vand.u32 %v56, 4294901760
    %v1738 = vsub.f32 %v56, %v1737
    %v1739 = vand.u32 %v1738, 4294901760
    %1740 = vmatpush.msra.mxu0 %v1739
    %v1741 = vand.u32 %v55, 4294901760
    %v1742 = vsub.f32 %v55, %v1741
    %v1743 = vand.u32 %v1742, 4294901760
    %1744 = vmatpush.msra.mxu0 %v1743
    %v1745 = vand.u32 %v54, 4294901760
    %v1746 = vsub.f32 %v54, %v1745
    %v1747 = vand.u32 %v1746, 4294901760
    %1748 = vmatpush.msra.mxu0 %v1747
    %v1749 = vand.u32 %v53, 4294901760
    %v1750 = vsub.f32 %v53, %v1749
    %v1751 = vand.u32 %v1750, 4294901760
    %1752 = vmatpush.msra.mxu0 %v1751
    %v1753 = vand.u32 %v52, 4294901760
    %v1754 = vsub.f32 %v52, %v1753
    %v1755 = vand.u32 %v1754, 4294901760
    %1756 = vmatpush.msra.mxu0 %v1755
    %v1757 = vand.u32 %v51, 4294901760
    %v1758 = vsub.f32 %v51, %v1757
    %v1759 = vand.u32 %v1758, 4294901760
    %1760 = vmatpush.msra.mxu0 %v1759
    %v1761 = vand.u32 %v50, 4294901760
    %v1762 = vsub.f32 %v50, %v1761
    %v1763 = vand.u32 %v1762, 4294901760
    %1764 = vmatpush.msra.mxu0 %v1763
    %v1765 = vand.u32 %v49, 4294901760
    %v1766 = vsub.f32 %v49, %v1765
    %v1767 = vand.u32 %v1766, 4294901760
    %1768 = vmatpush.msra.mxu0 %v1767
    %v1769 = vand.u32 %v48, 4294901760
    %v1770 = vsub.f32 %v48, %v1769
    %v1771 = vand.u32 %v1770, 4294901760
    %1772 = vmatpush.msra.mxu0 %v1771
    %v1773 = vand.u32 %v1468, 4294901760
    %1774 = vmatmul.f32.gmra.mxu0 %v1773
    %v1775 = vpop.f32.mrf.mxu0
    %v1776 = vadd.f32 %v1707, %v1775
    %1777 = vdwg.mxu0
    %v1778 = vand.u32 %v63, 4294901760
    %1779 = vmatpush.msra.mxu0 %v1778
    %v1780 = vand.u32 %v62, 4294901760
    %1781 = vmatpush.msra.mxu0 %v1780
    %v1782 = vand.u32 %v61, 4294901760
    %1783 = vmatpush.msra.mxu0 %v1782
    %v1784 = vand.u32 %v60, 4294901760
    %1785 = vmatpush.msra.mxu0 %v1784
    %v1786 = vand.u32 %v59, 4294901760
    %1787 = vmatpush.msra.mxu0 %v1786
    %v1788 = vand.u32 %v58, 4294901760
    %1789 = vmatpush.msra.mxu0 %v1788
    %v1790 = vand.u32 %v57, 4294901760
    %1791 = vmatpush.msra.mxu0 %v1790
    %v1792 = vand.u32 %v56, 4294901760
    %1793 = vmatpush.msra.mxu0 %v1792
    %v1794 = vand.u32 %v55, 4294901760
    %1795 = vmatpush.msra.mxu0 %v1794
    %v1796 = vand.u32 %v54, 4294901760
    %1797 = vmatpush.msra.mxu0 %v1796
    %v1798 = vand.u32 %v53, 4294901760
    %1799 = vmatpush.msra.mxu0 %v1798
    %v1800 = vand.u32 %v52, 4294901760
    %1801 = vmatpush.msra.mxu0 %v1800
    %v1802 = vand.u32 %v51, 4294901760
    %1803 = vmatpush.msra.mxu0 %v1802
    %v1804 = vand.u32 %v50, 4294901760
    %1805 = vmatpush.msra.mxu0 %v1804
    %v1806 = vand.u32 %v49, 4294901760
    %1807 = vmatpush.msra.mxu0 %v1806
    %v1808 = vand.u32 %v48, 4294901760
    %1809 = vmatpush.msra.mxu0 %v1808
    %v1810 = vand.u32 %v1468, 4294901760
    %1811 = vmatmul.f32.gmra.mxu0 %v1810
    %v1812 = vpop.f32.mrf.mxu0
    %v1813 = vadd.f32 %v1776, %v1812
    %1814 = vdwg.mxu0
    %v1815 = vtanh.pop %v1813
    %v1816 = vmul.f32 %v1815, 0.001
    %v1817 = vadd.f32 %v1465, %v1816
    %v1818 = vmul.f32 %v1817, 0.5
    %v1819 = vadd.f32 %v1818, 1.0
    %v1820 = vmul.f32 %v1819, %v1815
    %s1821 = scalar_lea.vmem [#allocation9], %s1471
    %1822 = vst [vmem:[%s1821] sm:$0x1] %v1820
    %s1823 = sadd.s32 0, 5
    %s1824 = scalar_lea.vmem [#allocation4], %s1823
    %v1825 = vld [vmem:[%s1824] sm:$0x1]
    %v1826 = vand.u32 %v63, 4294901760
    %1827 = vmatpush.msra.mxu0 %v1826
    %v1828 = vand.u32 %v62, 4294901760
    %1829 = vmatpush.msra.mxu0 %v1828
    %v1830 = vand.u32 %v61, 4294901760
    %1831 = vmatpush.msra.mxu0 %v1830
    %v1832 = vand.u32 %v60, 4294901760
    %1833 = vmatpush.msra.mxu0 %v1832
    %v1834 = vand.u32 %v59, 4294901760
    %1835 = vmatpush.msra.mxu0 %v1834
    %v1836 = vand.u32 %v58, 4294901760
    %1837 = vmatpush.msra.mxu0 %v1836
    %v1838 = vand.u32 %v57, 4294901760
    %1839 = vmatpush.msra.mxu0 %v1838
    %v1840 = vand.u32 %v56, 4294901760
    %1841 = vmatpush.msra.mxu0 %v1840
    %v1842 = vand.u32 %v55, 4294901760
    %1843 = vmatpush.msra.mxu0 %v1842
    %v1844 = vand.u32 %v54, 4294901760
    %1845 = vmatpush.msra.mxu0 %v1844
    %v1846 = vand.u32 %v53, 4294901760
    %1847 = vmatpush.msra.mxu0 %v1846
    %v1848 = vand.u32 %v52, 4294901760
    %1849 = vmatpush.msra.mxu0 %v1848
    %v1850 = vand.u32 %v51, 4294901760
    %1851 = vmatpush.msra.mxu0 %v1850
    %v1852 = vand.u32 %v50, 4294901760
    %1853 = vmatpush.msra.mxu0 %v1852
    %v1854 = vand.u32 %v49, 4294901760
    %1855 = vmatpush.msra.mxu0 %v1854
    %v1856 = vand.u32 %v48, 4294901760
    %1857 = vmatpush.msra.mxu0 %v1856
    %v1858 = vand.u32 %v1820, 4294901760
    %v1859 = vsub.f32 %v1820, %v1858
    %v1860 = vand.u32 %v1859, 4294901760
    %v1861 = vsub.f32 %v1859, %v1860
    %v1862 = vand.u32 %v1861, 4294901760
    %1863 = vmatmul.f32.gmra.mxu0 %v1862
    %v1864 = vpop.f32.mrf.mxu0
    %v1865 = vadd.f32 %v1825, %v1864
    %1866 = vdwg.mxu0
    %v1867 = vand.u32 %v63, 4294901760
    %v1868 = vsub.f32 %v63, %v1867
    %v1869 = vand.u32 %v1868, 4294901760
    %v1870 = vsub.f32 %v1868, %v1869
    %v1871 = vand.u32 %v1870, 4294901760
    %1872 = vmatpush.msra.mxu0 %v1871
    %v1873 = vand.u32 %v62, 4294901760
    %v1874 = vsub.f32 %v62, %v1873
    %v1875 = vand.u32 %v1874, 4294901760
    %v1876 = vsub.f32 %v1874, %v1875
    %v1877 = vand.u32 %v1876, 4294901760
    %1878 = vmatpush.msra.mxu0 %v1877
    %v1879 = vand.u32 %v61, 4294901760
    %v1880 = vsub.f32 %v61, %v1879
    %v1881 = vand.u32 %v1880, 4294901760
    %v1882 = vsub.f32 %v1880, %v1881
    %v1883 = vand.u32 %v1882, 4294901760
    %1884 = vmatpush.msra.mxu0 %v1883
    %v1885 = vand.u32 %v60, 4294901760
    %v1886 = vsub.f32 %v60, %v1885
    %v1887 = vand.u32 %v1886, 4294901760
    %v1888 = vsub.f32 %v1886, %v1887
    %v1889 = vand.u32 %v1888, 4294901760
    %1890 = vmatpush.msra.mxu0 %v1889
    %v1891 = vand.u32 %v59, 4294901760
    %v1892 = vsub.f32 %v59, %v1891
    %v1893 = vand.u32 %v1892, 4294901760
    %v1894 = vsub.f32 %v1892, %v1893
    %v1895 = vand.u32 %v1894, 4294901760
    %1896 = vmatpush.msra.mxu0 %v1895
    %v1897 = vand.u32 %v58, 4294901760
    %v1898 = vsub.f32 %v58, %v1897
    %v1899 = vand.u32 %v1898, 4294901760
    %v1900 = vsub.f32 %v1898, %v1899
    %v1901 = vand.u32 %v1900, 4294901760
    %1902 = vmatpush.msra.mxu0 %v1901
    %v1903 = vand.u32 %v57, 4294901760
    %v1904 = vsub.f32 %v57, %v1903
    %v1905 = vand.u32 %v1904, 4294901760
    %v1906 = vsub.f32 %v1904, %v1905
    %v1907 = vand.u32 %v1906, 4294901760
    %1908 = vmatpush.msra.mxu0 %v1907
    %v1909 = vand.u32 %v56, 4294901760
    %v1910 = vsub.f32 %v56, %v1909
    %v1911 = vand.u32 %v1910, 4294901760
    %v1912 = vsub.f32 %v1910, %v1911
    %v1913 = vand.u32 %v1912, 4294901760
    %1914 = vmatpush.msra.mxu0 %v1913
    %v1915 = vand.u32 %v55, 4294901760
    %v1916 = vsub.f32 %v55, %v1915
    %v1917 = vand.u32 %v1916, 4294901760
    %v1918 = vsub.f32 %v1916, %v1917
    %v1919 = vand.u32 %v1918, 4294901760
    %1920 = vmatpush.msra.mxu0 %v1919
    %v1921 = vand.u32 %v54, 4294901760
    %v1922 = vsub.f32 %v54, %v1921
    %v1923 = vand.u32 %v1922, 4294901760
    %v1924 = vsub.f32 %v1922, %v1923
    %v1925 = vand.u32 %v1924, 4294901760
    %1926 = vmatpush.msra.mxu0 %v1925
    %v1927 = vand.u32 %v53, 4294901760
    %v1928 = vsub.f32 %v53, %v1927
    %v1929 = vand.u32 %v1928, 4294901760
    %v1930 = vsub.f32 %v1928, %v1929
    %v1931 = vand.u32 %v1930, 4294901760
    %1932 = vmatpush.msra.mxu0 %v1931
    %v1933 = vand.u32 %v52, 4294901760
    %v1934 = vsub.f32 %v52, %v1933
    %v1935 = vand.u32 %v1934, 4294901760
    %v1936 = vsub.f32 %v1934, %v1935
    %v1937 = vand.u32 %v1936, 4294901760
    %1938 = vmatpush.msra.mxu0 %v1937
    %v1939 = vand.u32 %v51, 4294901760
    %v1940 = vsub.f32 %v51, %v1939
    %v1941 = vand.u32 %v1940, 4294901760
    %v1942 = vsub.f32 %v1940, %v1941
    %v1943 = vand.u32 %v1942, 4294901760
    %1944 = vmatpush.msra.mxu0 %v1943
    %v1945 = vand.u32 %v50, 4294901760
    %v1946 = vsub.f32 %v50, %v1945
    %v1947 = vand.u32 %v1946, 4294901760
    %v1948 = vsub.f32 %v1946, %v1947
    %v1949 = vand.u32 %v1948, 4294901760
    %1950 = vmatpush.msra.mxu0 %v1949
    %v1951 = vand.u32 %v49, 4294901760
    %v1952 = vsub.f32 %v49, %v1951
    %v1953 = vand.u32 %v1952, 4294901760
    %v1954 = vsub.f32 %v1952, %v1953
    %v1955 = vand.u32 %v1954, 4294901760
    %1956 = vmatpush.msra.mxu0 %v1955
    %v1957 = vand.u32 %v48, 4294901760
    %v1958 = vsub.f32 %v48, %v1957
    %v1959 = vand.u32 %v1958, 4294901760
    %v1960 = vsub.f32 %v1958, %v1959
    %v1961 = vand.u32 %v1960, 4294901760
    %1962 = vmatpush.msra.mxu0 %v1961
    %v1963 = vand.u32 %v1820, 4294901760
    %1964 = vmatmul.f32.gmra.mxu0 %v1963
    %v1965 = vpop.f32.mrf.mxu0
    %v1966 = vadd.f32 %v1865, %v1965
    %1967 = vdwg.mxu0
    %v1968 = vand.u32 %v63, 4294901760
    %v1969 = vsub.f32 %v63, %v1968
    %1970 = vmatpush.msra.mxu0 %v1969
    %v1971 = vand.u32 %v62, 4294901760
    %v1972 = vsub.f32 %v62, %v1971
    %1973 = vmatpush.msra.mxu0 %v1972
    %v1974 = vand.u32 %v61, 4294901760
    %v1975 = vsub.f32 %v61, %v1974
    %1976 = vmatpush.msra.mxu0 %v1975
    %v1977 = vand.u32 %v60, 4294901760
    %v1978 = vsub.f32 %v60, %v1977
    %1979 = vmatpush.msra.mxu0 %v1978
    %v1980 = vand.u32 %v59, 4294901760
    %v1981 = vsub.f32 %v59, %v1980
    %1982 = vmatpush.msra.mxu0 %v1981
    %v1983 = vand.u32 %v58, 4294901760
    %v1984 = vsub.f32 %v58, %v1983
    %1985 = vmatpush.msra.mxu0 %v1984
    %v1986 = vand.u32 %v57, 4294901760
    %v1987 = vsub.f32 %v57, %v1986
    %1988 = vmatpush.msra.mxu0 %v1987
    %v1989 = vand.u32 %v56, 4294901760
    %v1990 = vsub.f32 %v56, %v1989
    %1991 = vmatpush.msra.mxu0 %v1990
    %v1992 = vand.u32 %v55, 4294901760
    %v1993 = vsub.f32 %v55, %v1992
    %1994 = vmatpush.msra.mxu0 %v1993
    %v1995 = vand.u32 %v54, 4294901760
    %v1996 = vsub.f32 %v54, %v1995
    %1997 = vmatpush.msra.mxu0 %v1996
    %v1998 = vand.u32 %v53, 4294901760
    %v1999 = vsub.f32 %v53, %v1998
    %2000 = vmatpush.msra.mxu0 %v1999
    %v2001 = vand.u32 %v52, 4294901760
    %v2002 = vsub.f32 %v52, %v2001
    %2003 = vmatpush.msra.mxu0 %v2002
    %v2004 = vand.u32 %v51, 4294901760
    %v2005 = vsub.f32 %v51, %v2004
    %2006 = vmatpush.msra.mxu0 %v2005
    %v2007 = vand.u32 %v50, 4294901760
    %v2008 = vsub.f32 %v50, %v2007
    %2009 = vmatpush.msra.mxu0 %v2008
    %v2010 = vand.u32 %v49, 4294901760
    %v2011 = vsub.f32 %v49, %v2010
    %2012 = vmatpush.msra.mxu0 %v2011
    %v2013 = vand.u32 %v48, 4294901760
    %v2014 = vsub.f32 %v48, %v2013
    %2015 = vmatpush.msra.mxu0 %v2014
    %v2016 = vand.u32 %v1820, 4294901760
    %v2017 = vsub.f32 %v1820, %v2016
    %2018 = vmatmul.f32.gmra.mxu0 %v2017
    %v2019 = vpop.f32.mrf.mxu0
    %v2020 = vadd.f32 %v1966, %v2019
    %2021 = vdwg.mxu0
    %v2022 = vand.u32 %v63, 4294901760
    %2023 = vmatpush.msra.mxu0 %v2022
    %v2024 = vand.u32 %v62, 4294901760
    %2025 = vmatpush.msra.mxu0 %v2024
    %v2026 = vand.u32 %v61, 4294901760
    %2027 = vmatpush.msra.mxu0 %v2026
    %v2028 = vand.u32 %v60, 4294901760
    %2029 = vmatpush.msra.mxu0 %v2028
    %v2030 = vand.u32 %v59, 4294901760
    %2031 = vmatpush.msra.mxu0 %v2030
    %v2032 = vand.u32 %v58, 4294901760
    %2033 = vmatpush.msra.mxu0 %v2032
    %v2034 = vand.u32 %v57, 4294901760
    %2035 = vmatpush.msra.mxu0 %v2034
    %v2036 = vand.u32 %v56, 4294901760
    %2037 = vmatpush.msra.mxu0 %v2036
    %v2038 = vand.u32 %v55, 4294901760
    %2039 = vmatpush.msra.mxu0 %v2038
    %v2040 = vand.u32 %v54, 4294901760
    %2041 = vmatpush.msra.mxu0 %v2040
    %v2042 = vand.u32 %v53, 4294901760
    %2043 = vmatpush.msra.mxu0 %v2042
    %v2044 = vand.u32 %v52, 4294901760
    %2045 = vmatpush.msra.mxu0 %v2044
    %v2046 = vand.u32 %v51, 4294901760
    %2047 = vmatpush.msra.mxu0 %v2046
    %v2048 = vand.u32 %v50, 4294901760
    %2049 = vmatpush.msra.mxu0 %v2048
    %v2050 = vand.u32 %v49, 4294901760
    %2051 = vmatpush.msra.mxu0 %v2050
    %v2052 = vand.u32 %v48, 4294901760
    %2053 = vmatpush.msra.mxu0 %v2052
    %v2054 = vand.u32 %v1820, 4294901760
    %v2055 = vsub.f32 %v1820, %v2054
    %v2056 = vand.u32 %v2055, 4294901760
    %2057 = vmatmul.f32.gmra.mxu0 %v2056
    %v2058 = vpop.f32.mrf.mxu0
    %v2059 = vadd.f32 %v2020, %v2058
    %2060 = vdwg.mxu0
    %v2061 = vand.u32 %v63, 4294901760
    %v2062 = vsub.f32 %v63, %v2061
    %v2063 = vand.u32 %v2062, 4294901760
    %2064 = vmatpush.msra.mxu0 %v2063
    %v2065 = vand.u32 %v62, 4294901760
    %v2066 = vsub.f32 %v62, %v2065
    %v2067 = vand.u32 %v2066, 4294901760
    %2068 = vmatpush.msra.mxu0 %v2067
    %v2069 = vand.u32 %v61, 4294901760
    %v2070 = vsub.f32 %v61, %v2069
    %v2071 = vand.u32 %v2070, 4294901760
    %2072 = vmatpush.msra.mxu0 %v2071
    %v2073 = vand.u32 %v60, 4294901760
    %v2074 = vsub.f32 %v60, %v2073
    %v2075 = vand.u32 %v2074, 4294901760
    %2076 = vmatpush.msra.mxu0 %v2075
    %v2077 = vand.u32 %v59, 4294901760
    %v2078 = vsub.f32 %v59, %v2077
    %v2079 = vand.u32 %v2078, 4294901760
    %2080 = vmatpush.msra.mxu0 %v2079
    %v2081 = vand.u32 %v58, 4294901760
    %v2082 = vsub.f32 %v58, %v2081
    %v2083 = vand.u32 %v2082, 4294901760
    %2084 = vmatpush.msra.mxu0 %v2083
    %v2085 = vand.u32 %v57, 4294901760
    %v2086 = vsub.f32 %v57, %v2085
    %v2087 = vand.u32 %v2086, 4294901760
    %2088 = vmatpush.msra.mxu0 %v2087
    %v2089 = vand.u32 %v56, 4294901760
    %v2090 = vsub.f32 %v56, %v2089
    %v2091 = vand.u32 %v2090, 4294901760
    %2092 = vmatpush.msra.mxu0 %v2091
    %v2093 = vand.u32 %v55, 4294901760
    %v2094 = vsub.f32 %v55, %v2093
    %v2095 = vand.u32 %v2094, 4294901760
    %2096 = vmatpush.msra.mxu0 %v2095
    %v2097 = vand.u32 %v54, 4294901760
    %v2098 = vsub.f32 %v54, %v2097
    %v2099 = vand.u32 %v2098, 4294901760
    %2100 = vmatpush.msra.mxu0 %v2099
    %v2101 = vand.u32 %v53, 4294901760
    %v2102 = vsub.f32 %v53, %v2101
    %v2103 = vand.u32 %v2102, 4294901760
    %2104 = vmatpush.msra.mxu0 %v2103
    %v2105 = vand.u32 %v52, 4294901760
    %v2106 = vsub.f32 %v52, %v2105
    %v2107 = vand.u32 %v2106, 4294901760
    %2108 = vmatpush.msra.mxu0 %v2107
    %v2109 = vand.u32 %v51, 4294901760
    %v2110 = vsub.f32 %v51, %v2109
    %v2111 = vand.u32 %v2110, 4294901760
    %2112 = vmatpush.msra.mxu0 %v2111
    %v2113 = vand.u32 %v50, 4294901760
    %v2114 = vsub.f32 %v50, %v2113
    %v2115 = vand.u32 %v2114, 4294901760
    %2116 = vmatpush.msra.mxu0 %v2115
    %v2117 = vand.u32 %v49, 4294901760
    %v2118 = vsub.f32 %v49, %v2117
    %v2119 = vand.u32 %v2118, 4294901760
    %2120 = vmatpush.msra.mxu0 %v2119
    %v2121 = vand.u32 %v48, 4294901760
    %v2122 = vsub.f32 %v48, %v2121
    %v2123 = vand.u32 %v2122, 4294901760
    %2124 = vmatpush.msra.mxu0 %v2123
    %v2125 = vand.u32 %v1820, 4294901760
    %2126 = vmatmul.f32.gmra.mxu0 %v2125
    %v2127 = vpop.f32.mrf.mxu0
    %v2128 = vadd.f32 %v2059, %v2127
    %2129 = vdwg.mxu0
    %v2130 = vand.u32 %v63, 4294901760
    %2131 = vmatpush.msra.mxu0 %v2130
    %v2132 = vand.u32 %v62, 4294901760
    %2133 = vmatpush.msra.mxu0 %v2132
    %v2134 = vand.u32 %v61, 4294901760
    %2135 = vmatpush.msra.mxu0 %v2134
    %v2136 = vand.u32 %v60, 4294901760
    %2137 = vmatpush.msra.mxu0 %v2136
    %v2138 = vand.u32 %v59, 4294901760
    %2139 = vmatpush.msra.mxu0 %v2138
    %v2140 = vand.u32 %v58, 4294901760
    %2141 = vmatpush.msra.mxu0 %v2140
    %v2142 = vand.u32 %v57, 4294901760
    %2143 = vmatpush.msra.mxu0 %v2142
    %v2144 = vand.u32 %v56, 4294901760
    %2145 = vmatpush.msra.mxu0 %v2144
    %v2146 = vand.u32 %v55, 4294901760
    %2147 = vmatpush.msra.mxu0 %v2146
    %v2148 = vand.u32 %v54, 4294901760
    %2149 = vmatpush.msra.mxu0 %v2148
    %v2150 = vand.u32 %v53, 4294901760
    %2151 = vmatpush.msra.mxu0 %v2150
    %v2152 = vand.u32 %v52, 4294901760
    %2153 = vmatpush.msra.mxu0 %v2152
    %v2154 = vand.u32 %v51, 4294901760
    %2155 = vmatpush.msra.mxu0 %v2154
    %v2156 = vand.u32 %v50, 4294901760
    %2157 = vmatpush.msra.mxu0 %v2156
    %v2158 = vand.u32 %v49, 4294901760
    %2159 = vmatpush.msra.mxu0 %v2158
    %v2160 = vand.u32 %v48, 4294901760
    %2161 = vmatpush.msra.mxu0 %v2160
    %v2162 = vand.u32 %v1820, 4294901760
    %2163 = vmatmul.f32.gmra.mxu0 %v2162
    %v2164 = vpop.f32.mrf.mxu0
    %v2165 = vadd.f32 %v2128, %v2164
    %2166 = vdwg.mxu0
    %v2167 = vtanh.pop %v2165
    %v2168 = vmul.f32 %v2167, 0.001
    %v2169 = vadd.f32 %v1817, %v2168
    %v2170 = vmul.f32 %v2169, 0.5
    %v2171 = vadd.f32 %v2170, 1.0
    %v2172 = vmul.f32 %v2171, %v2167
    %s2173 = scalar_lea.vmem [#allocation9], %s1823
    %2174 = vst [vmem:[%s2173] sm:$0x1] %v2172
    %s2175 = sadd.s32 0, 6
    %s2176 = scalar_lea.vmem [#allocation4], %s2175
    %v2177 = vld [vmem:[%s2176] sm:$0x1]
    %v2178 = vand.u32 %v63, 4294901760
    %2179 = vmatpush.msra.mxu0 %v2178
    %v2180 = vand.u32 %v62, 4294901760
    %2181 = vmatpush.msra.mxu0 %v2180
    %v2182 = vand.u32 %v61, 4294901760
    %2183 = vmatpush.msra.mxu0 %v2182
    %v2184 = vand.u32 %v60, 4294901760
    %2185 = vmatpush.msra.mxu0 %v2184
    %v2186 = vand.u32 %v59, 4294901760
    %2187 = vmatpush.msra.mxu0 %v2186
    %v2188 = vand.u32 %v58, 4294901760
    %2189 = vmatpush.msra.mxu0 %v2188
    %v2190 = vand.u32 %v57, 4294901760
    %2191 = vmatpush.msra.mxu0 %v2190
    %v2192 = vand.u32 %v56, 4294901760
    %2193 = vmatpush.msra.mxu0 %v2192
    %v2194 = vand.u32 %v55, 4294901760
    %2195 = vmatpush.msra.mxu0 %v2194
    %v2196 = vand.u32 %v54, 4294901760
    %2197 = vmatpush.msra.mxu0 %v2196
    %v2198 = vand.u32 %v53, 4294901760
    %2199 = vmatpush.msra.mxu0 %v2198
    %v2200 = vand.u32 %v52, 4294901760
    %2201 = vmatpush.msra.mxu0 %v2200
    %v2202 = vand.u32 %v51, 4294901760
    %2203 = vmatpush.msra.mxu0 %v2202
    %v2204 = vand.u32 %v50, 4294901760
    %2205 = vmatpush.msra.mxu0 %v2204
    %v2206 = vand.u32 %v49, 4294901760
    %2207 = vmatpush.msra.mxu0 %v2206
    %v2208 = vand.u32 %v48, 4294901760
    %2209 = vmatpush.msra.mxu0 %v2208
    %v2210 = vand.u32 %v2172, 4294901760
    %v2211 = vsub.f32 %v2172, %v2210
    %v2212 = vand.u32 %v2211, 4294901760
    %v2213 = vsub.f32 %v2211, %v2212
    %v2214 = vand.u32 %v2213, 4294901760
    %2215 = vmatmul.f32.gmra.mxu0 %v2214
    %v2216 = vpop.f32.mrf.mxu0
    %v2217 = vadd.f32 %v2177, %v2216
    %2218 = vdwg.mxu0
    %v2219 = vand.u32 %v63, 4294901760
    %v2220 = vsub.f32 %v63, %v2219
    %v2221 = vand.u32 %v2220, 4294901760
    %v2222 = vsub.f32 %v2220, %v2221
    %v2223 = vand.u32 %v2222, 4294901760
    %2224 = vmatpush.msra.mxu0 %v2223
    %v2225 = vand.u32 %v62, 4294901760
    %v2226 = vsub.f32 %v62, %v2225
    %v2227 = vand.u32 %v2226, 4294901760
    %v2228 = vsub.f32 %v2226, %v2227
    %v2229 = vand.u32 %v2228, 4294901760
    %2230 = vmatpush.msra.mxu0 %v2229
    %v2231 = vand.u32 %v61, 4294901760
    %v2232 = vsub.f32 %v61, %v2231
    %v2233 = vand.u32 %v2232, 4294901760
    %v2234 = vsub.f32 %v2232, %v2233
    %v2235 = vand.u32 %v2234, 4294901760
    %2236 = vmatpush.msra.mxu0 %v2235
    %v2237 = vand.u32 %v60, 4294901760
    %v2238 = vsub.f32 %v60, %v2237
    %v2239 = vand.u32 %v2238, 4294901760
    %v2240 = vsub.f32 %v2238, %v2239
    %v2241 = vand.u32 %v2240, 4294901760
    %2242 = vmatpush.msra.mxu0 %v2241
    %v2243 = vand.u32 %v59, 4294901760
    %v2244 = vsub.f32 %v59, %v2243
    %v2245 = vand.u32 %v2244, 4294901760
    %v2246 = vsub.f32 %v2244, %v2245
    %v2247 = vand.u32 %v2246, 4294901760
    %2248 = vmatpush.msra.mxu0 %v2247
    %v2249 = vand.u32 %v58, 4294901760
    %v2250 = vsub.f32 %v58, %v2249
    %v2251 = vand.u32 %v2250, 4294901760
    %v2252 = vsub.f32 %v2250, %v2251
    %v2253 = vand.u32 %v2252, 4294901760
    %2254 = vmatpush.msra.mxu0 %v2253
    %v2255 = vand.u32 %v57, 4294901760
    %v2256 = vsub.f32 %v57, %v2255
    %v2257 = vand.u32 %v2256, 4294901760
    %v2258 = vsub.f32 %v2256, %v2257
    %v2259 = vand.u32 %v2258, 4294901760
    %2260 = vmatpush.msra.mxu0 %v2259
    %v2261 = vand.u32 %v56, 4294901760
    %v2262 = vsub.f32 %v56, %v2261
    %v2263 = vand.u32 %v2262, 4294901760
    %v2264 = vsub.f32 %v2262, %v2263
    %v2265 = vand.u32 %v2264, 4294901760
    %2266 = vmatpush.msra.mxu0 %v2265
    %v2267 = vand.u32 %v55, 4294901760
    %v2268 = vsub.f32 %v55, %v2267
    %v2269 = vand.u32 %v2268, 4294901760
    %v2270 = vsub.f32 %v2268, %v2269
    %v2271 = vand.u32 %v2270, 4294901760
    %2272 = vmatpush.msra.mxu0 %v2271
    %v2273 = vand.u32 %v54, 4294901760
    %v2274 = vsub.f32 %v54, %v2273
    %v2275 = vand.u32 %v2274, 4294901760
    %v2276 = vsub.f32 %v2274, %v2275
    %v2277 = vand.u32 %v2276, 4294901760
    %2278 = vmatpush.msra.mxu0 %v2277
    %v2279 = vand.u32 %v53, 4294901760
    %v2280 = vsub.f32 %v53, %v2279
    %v2281 = vand.u32 %v2280, 4294901760
    %v2282 = vsub.f32 %v2280, %v2281
    %v2283 = vand.u32 %v2282, 4294901760
    %2284 = vmatpush.msra.mxu0 %v2283
    %v2285 = vand.u32 %v52, 4294901760
    %v2286 = vsub.f32 %v52, %v2285
    %v2287 = vand.u32 %v2286, 4294901760
    %v2288 = vsub.f32 %v2286, %v2287
    %v2289 = vand.u32 %v2288, 4294901760
    %2290 = vmatpush.msra.mxu0 %v2289
    %v2291 = vand.u32 %v51, 4294901760
    %v2292 = vsub.f32 %v51, %v2291
    %v2293 = vand.u32 %v2292, 4294901760
    %v2294 = vsub.f32 %v2292, %v2293
    %v2295 = vand.u32 %v2294, 4294901760
    %2296 = vmatpush.msra.mxu0 %v2295
    %v2297 = vand.u32 %v50, 4294901760
    %v2298 = vsub.f32 %v50, %v2297
    %v2299 = vand.u32 %v2298, 4294901760
    %v2300 = vsub.f32 %v2298, %v2299
    %v2301 = vand.u32 %v2300, 4294901760
    %2302 = vmatpush.msra.mxu0 %v2301
    %v2303 = vand.u32 %v49, 4294901760
    %v2304 = vsub.f32 %v49, %v2303
    %v2305 = vand.u32 %v2304, 4294901760
    %v2306 = vsub.f32 %v2304, %v2305
    %v2307 = vand.u32 %v2306, 4294901760
    %2308 = vmatpush.msra.mxu0 %v2307
    %v2309 = vand.u32 %v48, 4294901760
    %v2310 = vsub.f32 %v48, %v2309
    %v2311 = vand.u32 %v2310, 4294901760
    %v2312 = vsub.f32 %v2310, %v2311
    %v2313 = vand.u32 %v2312, 4294901760
    %2314 = vmatpush.msra.mxu0 %v2313
    %v2315 = vand.u32 %v2172, 4294901760
    %2316 = vmatmul.f32.gmra.mxu0 %v2315
    %v2317 = vpop.f32.mrf.mxu0
    %v2318 = vadd.f32 %v2217, %v2317
    %2319 = vdwg.mxu0
    %v2320 = vand.u32 %v63, 4294901760
    %v2321 = vsub.f32 %v63, %v2320
    %2322 = vmatpush.msra.mxu0 %v2321
    %v2323 = vand.u32 %v62, 4294901760
    %v2324 = vsub.f32 %v62, %v2323
    %2325 = vmatpush.msra.mxu0 %v2324
    %v2326 = vand.u32 %v61, 4294901760
    %v2327 = vsub.f32 %v61, %v2326
    %2328 = vmatpush.msra.mxu0 %v2327
    %v2329 = vand.u32 %v60, 4294901760
    %v2330 = vsub.f32 %v60, %v2329
    %2331 = vmatpush.msra.mxu0 %v2330
    %v2332 = vand.u32 %v59, 4294901760
    %v2333 = vsub.f32 %v59, %v2332
    %2334 = vmatpush.msra.mxu0 %v2333
    %v2335 = vand.u32 %v58, 4294901760
    %v2336 = vsub.f32 %v58, %v2335
    %2337 = vmatpush.msra.mxu0 %v2336
    %v2338 = vand.u32 %v57, 4294901760
    %v2339 = vsub.f32 %v57, %v2338
    %2340 = vmatpush.msra.mxu0 %v2339
    %v2341 = vand.u32 %v56, 4294901760
    %v2342 = vsub.f32 %v56, %v2341
    %2343 = vmatpush.msra.mxu0 %v2342
    %v2344 = vand.u32 %v55, 4294901760
    %v2345 = vsub.f32 %v55, %v2344
    %2346 = vmatpush.msra.mxu0 %v2345
    %v2347 = vand.u32 %v54, 4294901760
    %v2348 = vsub.f32 %v54, %v2347
    %2349 = vmatpush.msra.mxu0 %v2348
    %v2350 = vand.u32 %v53, 4294901760
    %v2351 = vsub.f32 %v53, %v2350
    %2352 = vmatpush.msra.mxu0 %v2351
    %v2353 = vand.u32 %v52, 4294901760
    %v2354 = vsub.f32 %v52, %v2353
    %2355 = vmatpush.msra.mxu0 %v2354
    %v2356 = vand.u32 %v51, 4294901760
    %v2357 = vsub.f32 %v51, %v2356
    %2358 = vmatpush.msra.mxu0 %v2357
    %v2359 = vand.u32 %v50, 4294901760
    %v2360 = vsub.f32 %v50, %v2359
    %2361 = vmatpush.msra.mxu0 %v2360
    %v2362 = vand.u32 %v49, 4294901760
    %v2363 = vsub.f32 %v49, %v2362
    %2364 = vmatpush.msra.mxu0 %v2363
    %v2365 = vand.u32 %v48, 4294901760
    %v2366 = vsub.f32 %v48, %v2365
    %2367 = vmatpush.msra.mxu0 %v2366
    %v2368 = vand.u32 %v2172, 4294901760
    %v2369 = vsub.f32 %v2172, %v2368
    %2370 = vmatmul.f32.gmra.mxu0 %v2369
    %v2371 = vpop.f32.mrf.mxu0
    %v2372 = vadd.f32 %v2318, %v2371
    %2373 = vdwg.mxu0
    %v2374 = vand.u32 %v63, 4294901760
    %2375 = vmatpush.msra.mxu0 %v2374
    %v2376 = vand.u32 %v62, 4294901760
    %2377 = vmatpush.msra.mxu0 %v2376
    %v2378 = vand.u32 %v61, 4294901760
    %2379 = vmatpush.msra.mxu0 %v2378
    %v2380 = vand.u32 %v60, 4294901760
    %2381 = vmatpush.msra.mxu0 %v2380
    %v2382 = vand.u32 %v59, 4294901760
    %2383 = vmatpush.msra.mxu0 %v2382
    %v2384 = vand.u32 %v58, 4294901760
    %2385 = vmatpush.msra.mxu0 %v2384
    %v2386 = vand.u32 %v57, 4294901760
    %2387 = vmatpush.msra.mxu0 %v2386
    %v2388 = vand.u32 %v56, 4294901760
    %2389 = vmatpush.msra.mxu0 %v2388
    %v2390 = vand.u32 %v55, 4294901760
    %2391 = vmatpush.msra.mxu0 %v2390
    %v2392 = vand.u32 %v54, 4294901760
    %2393 = vmatpush.msra.mxu0 %v2392
    %v2394 = vand.u32 %v53, 4294901760
    %2395 = vmatpush.msra.mxu0 %v2394
    %v2396 = vand.u32 %v52, 4294901760
    %2397 = vmatpush.msra.mxu0 %v2396
    %v2398 = vand.u32 %v51, 4294901760
    %2399 = vmatpush.msra.mxu0 %v2398
    %v2400 = vand.u32 %v50, 4294901760
    %2401 = vmatpush.msra.mxu0 %v2400
    %v2402 = vand.u32 %v49, 4294901760
    %2403 = vmatpush.msra.mxu0 %v2402
    %v2404 = vand.u32 %v48, 4294901760
    %2405 = vmatpush.msra.mxu0 %v2404
    %v2406 = vand.u32 %v2172, 4294901760
    %v2407 = vsub.f32 %v2172, %v2406
    %v2408 = vand.u32 %v2407, 4294901760
    %2409 = vmatmul.f32.gmra.mxu0 %v2408
    %v2410 = vpop.f32.mrf.mxu0
    %v2411 = vadd.f32 %v2372, %v2410
    %2412 = vdwg.mxu0
    %v2413 = vand.u32 %v63, 4294901760
    %v2414 = vsub.f32 %v63, %v2413
    %v2415 = vand.u32 %v2414, 4294901760
    %2416 = vmatpush.msra.mxu0 %v2415
    %v2417 = vand.u32 %v62, 4294901760
    %v2418 = vsub.f32 %v62, %v2417
    %v2419 = vand.u32 %v2418, 4294901760
    %2420 = vmatpush.msra.mxu0 %v2419
    %v2421 = vand.u32 %v61, 4294901760
    %v2422 = vsub.f32 %v61, %v2421
    %v2423 = vand.u32 %v2422, 4294901760
    %2424 = vmatpush.msra.mxu0 %v2423
    %v2425 = vand.u32 %v60, 4294901760
    %v2426 = vsub.f32 %v60, %v2425
    %v2427 = vand.u32 %v2426, 4294901760
    %2428 = vmatpush.msra.mxu0 %v2427
    %v2429 = vand.u32 %v59, 4294901760
    %v2430 = vsub.f32 %v59, %v2429
    %v2431 = vand.u32 %v2430, 4294901760
    %2432 = vmatpush.msra.mxu0 %v2431
    %v2433 = vand.u32 %v58, 4294901760
    %v2434 = vsub.f32 %v58, %v2433
    %v2435 = vand.u32 %v2434, 4294901760
    %2436 = vmatpush.msra.mxu0 %v2435
    %v2437 = vand.u32 %v57, 4294901760
    %v2438 = vsub.f32 %v57, %v2437
    %v2439 = vand.u32 %v2438, 4294901760
    %2440 = vmatpush.msra.mxu0 %v2439
    %v2441 = vand.u32 %v56, 4294901760
    %v2442 = vsub.f32 %v56, %v2441
    %v2443 = vand.u32 %v2442, 4294901760
    %2444 = vmatpush.msra.mxu0 %v2443
    %v2445 = vand.u32 %v55, 4294901760
    %v2446 = vsub.f32 %v55, %v2445
    %v2447 = vand.u32 %v2446, 4294901760
    %2448 = vmatpush.msra.mxu0 %v2447
    %v2449 = vand.u32 %v54, 4294901760
    %v2450 = vsub.f32 %v54, %v2449
    %v2451 = vand.u32 %v2450, 4294901760
    %2452 = vmatpush.msra.mxu0 %v2451
    %v2453 = vand.u32 %v53, 4294901760
    %v2454 = vsub.f32 %v53, %v2453
    %v2455 = vand.u32 %v2454, 4294901760
    %2456 = vmatpush.msra.mxu0 %v2455
    %v2457 = vand.u32 %v52, 4294901760
    %v2458 = vsub.f32 %v52, %v2457
    %v2459 = vand.u32 %v2458, 4294901760
    %2460 = vmatpush.msra.mxu0 %v2459
    %v2461 = vand.u32 %v51, 4294901760
    %v2462 = vsub.f32 %v51, %v2461
    %v2463 = vand.u32 %v2462, 4294901760
    %2464 = vmatpush.msra.mxu0 %v2463
    %v2465 = vand.u32 %v50, 4294901760
    %v2466 = vsub.f32 %v50, %v2465
    %v2467 = vand.u32 %v2466, 4294901760
    %2468 = vmatpush.msra.mxu0 %v2467
    %v2469 = vand.u32 %v49, 4294901760
    %v2470 = vsub.f32 %v49, %v2469
    %v2471 = vand.u32 %v2470, 4294901760
    %2472 = vmatpush.msra.mxu0 %v2471
    %v2473 = vand.u32 %v48, 4294901760
    %v2474 = vsub.f32 %v48, %v2473
    %v2475 = vand.u32 %v2474, 4294901760
    %2476 = vmatpush.msra.mxu0 %v2475
    %v2477 = vand.u32 %v2172, 4294901760
    %2478 = vmatmul.f32.gmra.mxu0 %v2477
    %v2479 = vpop.f32.mrf.mxu0
    %v2480 = vadd.f32 %v2411, %v2479
    %2481 = vdwg.mxu0
    %v2482 = vand.u32 %v63, 4294901760
    %2483 = vmatpush.msra.mxu0 %v2482
    %v2484 = vand.u32 %v62, 4294901760
    %2485 = vmatpush.msra.mxu0 %v2484
    %v2486 = vand.u32 %v61, 4294901760
    %2487 = vmatpush.msra.mxu0 %v2486
    %v2488 = vand.u32 %v60, 4294901760
    %2489 = vmatpush.msra.mxu0 %v2488
    %v2490 = vand.u32 %v59, 4294901760
    %2491 = vmatpush.msra.mxu0 %v2490
    %v2492 = vand.u32 %v58, 4294901760
    %2493 = vmatpush.msra.mxu0 %v2492
    %v2494 = vand.u32 %v57, 4294901760
    %2495 = vmatpush.msra.mxu0 %v2494
    %v2496 = vand.u32 %v56, 4294901760
    %2497 = vmatpush.msra.mxu0 %v2496
    %v2498 = vand.u32 %v55, 4294901760
    %2499 = vmatpush.msra.mxu0 %v2498
    %v2500 = vand.u32 %v54, 4294901760
    %2501 = vmatpush.msra.mxu0 %v2500
    %v2502 = vand.u32 %v53, 4294901760
    %2503 = vmatpush.msra.mxu0 %v2502
    %v2504 = vand.u32 %v52, 4294901760
    %2505 = vmatpush.msra.mxu0 %v2504
    %v2506 = vand.u32 %v51, 4294901760
    %2507 = vmatpush.msra.mxu0 %v2506
    %v2508 = vand.u32 %v50, 4294901760
    %2509 = vmatpush.msra.mxu0 %v2508
    %v2510 = vand.u32 %v49, 4294901760
    %2511 = vmatpush.msra.mxu0 %v2510
    %v2512 = vand.u32 %v48, 4294901760
    %2513 = vmatpush.msra.mxu0 %v2512
    %v2514 = vand.u32 %v2172, 4294901760
    %2515 = vmatmul.f32.gmra.mxu0 %v2514
    %v2516 = vpop.f32.mrf.mxu0
    %v2517 = vadd.f32 %v2480, %v2516
    %2518 = vdwg.mxu0
    %v2519 = vtanh.pop %v2517
    %v2520 = vmul.f32 %v2519, 0.001
    %v2521 = vadd.f32 %v2169, %v2520
    %v2522 = vmul.f32 %v2521, 0.5
    %v2523 = vadd.f32 %v2522, 1.0
    %v2524 = vmul.f32 %v2523, %v2519
    %s2525 = scalar_lea.vmem [#allocation9], %s2175
    %2526 = vst [vmem:[%s2525] sm:$0x1] %v2524
    %s2527 = sadd.s32 0, 7
    %s2528 = scalar_lea.vmem [#allocation4], %s2527
    %v2529 = vld [vmem:[%s2528] sm:$0x1]
    %v2530 = vand.u32 %v63, 4294901760
    %2531 = vmatpush.msra.mxu0 %v2530
    %v2532 = vand.u32 %v62, 4294901760
    %2533 = vmatpush.msra.mxu0 %v2532
    %v2534 = vand.u32 %v61, 4294901760
    %2535 = vmatpush.msra.mxu0 %v2534
    %v2536 = vand.u32 %v60, 4294901760
    %2537 = vmatpush.msra.mxu0 %v2536
    %v2538 = vand.u32 %v59, 4294901760
    %2539 = vmatpush.msra.mxu0 %v2538
    %v2540 = vand.u32 %v58, 4294901760
    %2541 = vmatpush.msra.mxu0 %v2540
    %v2542 = vand.u32 %v57, 4294901760
    %2543 = vmatpush.msra.mxu0 %v2542
    %v2544 = vand.u32 %v56, 4294901760
    %2545 = vmatpush.msra.mxu0 %v2544
    %v2546 = vand.u32 %v55, 4294901760
    %2547 = vmatpush.msra.mxu0 %v2546
    %v2548 = vand.u32 %v54, 4294901760
    %2549 = vmatpush.msra.mxu0 %v2548
    %v2550 = vand.u32 %v53, 4294901760
    %2551 = vmatpush.msra.mxu0 %v2550
    %v2552 = vand.u32 %v52, 4294901760
    %2553 = vmatpush.msra.mxu0 %v2552
    %v2554 = vand.u32 %v51, 4294901760
    %2555 = vmatpush.msra.mxu0 %v2554
    %v2556 = vand.u32 %v50, 4294901760
    %2557 = vmatpush.msra.mxu0 %v2556
    %v2558 = vand.u32 %v49, 4294901760
    %2559 = vmatpush.msra.mxu0 %v2558
    %v2560 = vand.u32 %v48, 4294901760
    %2561 = vmatpush.msra.mxu0 %v2560
    %v2562 = vand.u32 %v2524, 4294901760
    %v2563 = vsub.f32 %v2524, %v2562
    %v2564 = vand.u32 %v2563, 4294901760
    %v2565 = vsub.f32 %v2563, %v2564
    %v2566 = vand.u32 %v2565, 4294901760
    %2567 = vmatmul.f32.gmra.mxu0 %v2566
    %v2568 = vpop.f32.mrf.mxu0
    %v2569 = vadd.f32 %v2529, %v2568
    %2570 = vdwg.mxu0
    %v2571 = vand.u32 %v63, 4294901760
    %v2572 = vsub.f32 %v63, %v2571
    %v2573 = vand.u32 %v2572, 4294901760
    %v2574 = vsub.f32 %v2572, %v2573
    %v2575 = vand.u32 %v2574, 4294901760
    %2576 = vmatpush.msra.mxu0 %v2575
    %v2577 = vand.u32 %v62, 4294901760
    %v2578 = vsub.f32 %v62, %v2577
    %v2579 = vand.u32 %v2578, 4294901760
    %v2580 = vsub.f32 %v2578, %v2579
    %v2581 = vand.u32 %v2580, 4294901760
    %2582 = vmatpush.msra.mxu0 %v2581
    %v2583 = vand.u32 %v61, 4294901760
    %v2584 = vsub.f32 %v61, %v2583
    %v2585 = vand.u32 %v2584, 4294901760
    %v2586 = vsub.f32 %v2584, %v2585
    %v2587 = vand.u32 %v2586, 4294901760
    %2588 = vmatpush.msra.mxu0 %v2587
    %v2589 = vand.u32 %v60, 4294901760
    %v2590 = vsub.f32 %v60, %v2589
    %v2591 = vand.u32 %v2590, 4294901760
    %v2592 = vsub.f32 %v2590, %v2591
    %v2593 = vand.u32 %v2592, 4294901760
    %2594 = vmatpush.msra.mxu0 %v2593
    %v2595 = vand.u32 %v59, 4294901760
    %v2596 = vsub.f32 %v59, %v2595
    %v2597 = vand.u32 %v2596, 4294901760
    %v2598 = vsub.f32 %v2596, %v2597
    %v2599 = vand.u32 %v2598, 4294901760
    %2600 = vmatpush.msra.mxu0 %v2599
    %v2601 = vand.u32 %v58, 4294901760
    %v2602 = vsub.f32 %v58, %v2601
    %v2603 = vand.u32 %v2602, 4294901760
    %v2604 = vsub.f32 %v2602, %v2603
    %v2605 = vand.u32 %v2604, 4294901760
    %2606 = vmatpush.msra.mxu0 %v2605
    %v2607 = vand.u32 %v57, 4294901760
    %v2608 = vsub.f32 %v57, %v2607
    %v2609 = vand.u32 %v2608, 4294901760
    %v2610 = vsub.f32 %v2608, %v2609
    %v2611 = vand.u32 %v2610, 4294901760
    %2612 = vmatpush.msra.mxu0 %v2611
    %v2613 = vand.u32 %v56, 4294901760
    %v2614 = vsub.f32 %v56, %v2613
    %v2615 = vand.u32 %v2614, 4294901760
    %v2616 = vsub.f32 %v2614, %v2615
    %v2617 = vand.u32 %v2616, 4294901760
    %2618 = vmatpush.msra.mxu0 %v2617
    %v2619 = vand.u32 %v55, 4294901760
    %v2620 = vsub.f32 %v55, %v2619
    %v2621 = vand.u32 %v2620, 4294901760
    %v2622 = vsub.f32 %v2620, %v2621
    %v2623 = vand.u32 %v2622, 4294901760
    %2624 = vmatpush.msra.mxu0 %v2623
    %v2625 = vand.u32 %v54, 4294901760
    %v2626 = vsub.f32 %v54, %v2625
    %v2627 = vand.u32 %v2626, 4294901760
    %v2628 = vsub.f32 %v2626, %v2627
    %v2629 = vand.u32 %v2628, 4294901760
    %2630 = vmatpush.msra.mxu0 %v2629
    %v2631 = vand.u32 %v53, 4294901760
    %v2632 = vsub.f32 %v53, %v2631
    %v2633 = vand.u32 %v2632, 4294901760
    %v2634 = vsub.f32 %v2632, %v2633
    %v2635 = vand.u32 %v2634, 4294901760
    %2636 = vmatpush.msra.mxu0 %v2635
    %v2637 = vand.u32 %v52, 4294901760
    %v2638 = vsub.f32 %v52, %v2637
    %v2639 = vand.u32 %v2638, 4294901760
    %v2640 = vsub.f32 %v2638, %v2639
    %v2641 = vand.u32 %v2640, 4294901760
    %2642 = vmatpush.msra.mxu0 %v2641
    %v2643 = vand.u32 %v51, 4294901760
    %v2644 = vsub.f32 %v51, %v2643
    %v2645 = vand.u32 %v2644, 4294901760
    %v2646 = vsub.f32 %v2644, %v2645
    %v2647 = vand.u32 %v2646, 4294901760
    %2648 = vmatpush.msra.mxu0 %v2647
    %v2649 = vand.u32 %v50, 4294901760
    %v2650 = vsub.f32 %v50, %v2649
    %v2651 = vand.u32 %v2650, 4294901760
    %v2652 = vsub.f32 %v2650, %v2651
    %v2653 = vand.u32 %v2652, 4294901760
    %2654 = vmatpush.msra.mxu0 %v2653
    %v2655 = vand.u32 %v49, 4294901760
    %v2656 = vsub.f32 %v49, %v2655
    %v2657 = vand.u32 %v2656, 4294901760
    %v2658 = vsub.f32 %v2656, %v2657
    %v2659 = vand.u32 %v2658, 4294901760
    %2660 = vmatpush.msra.mxu0 %v2659
    %v2661 = vand.u32 %v48, 4294901760
    %v2662 = vsub.f32 %v48, %v2661
    %v2663 = vand.u32 %v2662, 4294901760
    %v2664 = vsub.f32 %v2662, %v2663
    %v2665 = vand.u32 %v2664, 4294901760
    %2666 = vmatpush.msra.mxu0 %v2665
    %v2667 = vand.u32 %v2524, 4294901760
    %2668 = vmatmul.f32.gmra.mxu0 %v2667
    %v2669 = vpop.f32.mrf.mxu0
    %v2670 = vadd.f32 %v2569, %v2669
    %2671 = vdwg.mxu0
    %v2672 = vand.u32 %v63, 4294901760
    %v2673 = vsub.f32 %v63, %v2672
    %2674 = vmatpush.msra.mxu0 %v2673
    %v2675 = vand.u32 %v62, 4294901760
    %v2676 = vsub.f32 %v62, %v2675
    %2677 = vmatpush.msra.mxu0 %v2676
    %v2678 = vand.u32 %v61, 4294901760
    %v2679 = vsub.f32 %v61, %v2678
    %2680 = vmatpush.msra.mxu0 %v2679
    %v2681 = vand.u32 %v60, 4294901760
    %v2682 = vsub.f32 %v60, %v2681
    %2683 = vmatpush.msra.mxu0 %v2682
    %v2684 = vand.u32 %v59, 4294901760
    %v2685 = vsub.f32 %v59, %v2684
    %2686 = vmatpush.msra.mxu0 %v2685
    %v2687 = vand.u32 %v58, 4294901760
    %v2688 = vsub.f32 %v58, %v2687
    %2689 = vmatpush.msra.mxu0 %v2688
    %v2690 = vand.u32 %v57, 4294901760
    %v2691 = vsub.f32 %v57, %v2690
    %2692 = vmatpush.msra.mxu0 %v2691
    %v2693 = vand.u32 %v56, 4294901760
    %v2694 = vsub.f32 %v56, %v2693
    %2695 = vmatpush.msra.mxu0 %v2694
    %v2696 = vand.u32 %v55, 4294901760
    %v2697 = vsub.f32 %v55, %v2696
    %2698 = vmatpush.msra.mxu0 %v2697
    %v2699 = vand.u32 %v54, 4294901760
    %v2700 = vsub.f32 %v54, %v2699
    %2701 = vmatpush.msra.mxu0 %v2700
    %v2702 = vand.u32 %v53, 4294901760
    %v2703 = vsub.f32 %v53, %v2702
    %2704 = vmatpush.msra.mxu0 %v2703
    %v2705 = vand.u32 %v52, 4294901760
    %v2706 = vsub.f32 %v52, %v2705
    %2707 = vmatpush.msra.mxu0 %v2706
    %v2708 = vand.u32 %v51, 4294901760
    %v2709 = vsub.f32 %v51, %v2708
    %2710 = vmatpush.msra.mxu0 %v2709
    %v2711 = vand.u32 %v50, 4294901760
    %v2712 = vsub.f32 %v50, %v2711
    %2713 = vmatpush.msra.mxu0 %v2712
    %v2714 = vand.u32 %v49, 4294901760
    %v2715 = vsub.f32 %v49, %v2714
    %2716 = vmatpush.msra.mxu0 %v2715
    %v2717 = vand.u32 %v48, 4294901760
    %v2718 = vsub.f32 %v48, %v2717
    %2719 = vmatpush.msra.mxu0 %v2718
    %v2720 = vand.u32 %v2524, 4294901760
    %v2721 = vsub.f32 %v2524, %v2720
    %2722 = vmatmul.f32.gmra.mxu0 %v2721
    %v2723 = vpop.f32.mrf.mxu0
    %v2724 = vadd.f32 %v2670, %v2723
    %2725 = vdwg.mxu0
    %v2726 = vand.u32 %v63, 4294901760
    %2727 = vmatpush.msra.mxu0 %v2726
    %v2728 = vand.u32 %v62, 4294901760
    %2729 = vmatpush.msra.mxu0 %v2728
    %v2730 = vand.u32 %v61, 4294901760
    %2731 = vmatpush.msra.mxu0 %v2730
    %v2732 = vand.u32 %v60, 4294901760
    %2733 = vmatpush.msra.mxu0 %v2732
    %v2734 = vand.u32 %v59, 4294901760
    %2735 = vmatpush.msra.mxu0 %v2734
    %v2736 = vand.u32 %v58, 4294901760
    %2737 = vmatpush.msra.mxu0 %v2736
    %v2738 = vand.u32 %v57, 4294901760
    %2739 = vmatpush.msra.mxu0 %v2738
    %v2740 = vand.u32 %v56, 4294901760
    %2741 = vmatpush.msra.mxu0 %v2740
    %v2742 = vand.u32 %v55, 4294901760
    %2743 = vmatpush.msra.mxu0 %v2742
    %v2744 = vand.u32 %v54, 4294901760
    %2745 = vmatpush.msra.mxu0 %v2744
    %v2746 = vand.u32 %v53, 4294901760
    %2747 = vmatpush.msra.mxu0 %v2746
    %v2748 = vand.u32 %v52, 4294901760
    %2749 = vmatpush.msra.mxu0 %v2748
    %v2750 = vand.u32 %v51, 4294901760
    %2751 = vmatpush.msra.mxu0 %v2750
    %v2752 = vand.u32 %v50, 4294901760
    %2753 = vmatpush.msra.mxu0 %v2752
    %v2754 = vand.u32 %v49, 4294901760
    %2755 = vmatpush.msra.mxu0 %v2754
    %v2756 = vand.u32 %v48, 4294901760
    %2757 = vmatpush.msra.mxu0 %v2756
    %v2758 = vand.u32 %v2524, 4294901760
    %v2759 = vsub.f32 %v2524, %v2758
    %v2760 = vand.u32 %v2759, 4294901760
    %2761 = vmatmul.f32.gmra.mxu0 %v2760
    %v2762 = vpop.f32.mrf.mxu0
    %v2763 = vadd.f32 %v2724, %v2762
    %2764 = vdwg.mxu0
    %v2765 = vand.u32 %v63, 4294901760
    %v2766 = vsub.f32 %v63, %v2765
    %v2767 = vand.u32 %v2766, 4294901760
    %2768 = vmatpush.msra.mxu0 %v2767
    %v2769 = vand.u32 %v62, 4294901760
    %v2770 = vsub.f32 %v62, %v2769
    %v2771 = vand.u32 %v2770, 4294901760
    %2772 = vmatpush.msra.mxu0 %v2771
    %v2773 = vand.u32 %v61, 4294901760
    %v2774 = vsub.f32 %v61, %v2773
    %v2775 = vand.u32 %v2774, 4294901760
    %2776 = vmatpush.msra.mxu0 %v2775
    %v2777 = vand.u32 %v60, 4294901760
    %v2778 = vsub.f32 %v60, %v2777
    %v2779 = vand.u32 %v2778, 4294901760
    %2780 = vmatpush.msra.mxu0 %v2779
    %v2781 = vand.u32 %v59, 4294901760
    %v2782 = vsub.f32 %v59, %v2781
    %v2783 = vand.u32 %v2782, 4294901760
    %2784 = vmatpush.msra.mxu0 %v2783
    %v2785 = vand.u32 %v58, 4294901760
    %v2786 = vsub.f32 %v58, %v2785
    %v2787 = vand.u32 %v2786, 4294901760
    %2788 = vmatpush.msra.mxu0 %v2787
    %v2789 = vand.u32 %v57, 4294901760
    %v2790 = vsub.f32 %v57, %v2789
    %v2791 = vand.u32 %v2790, 4294901760
    %2792 = vmatpush.msra.mxu0 %v2791
    %v2793 = vand.u32 %v56, 4294901760
    %v2794 = vsub.f32 %v56, %v2793
    %v2795 = vand.u32 %v2794, 4294901760
    %2796 = vmatpush.msra.mxu0 %v2795
    %v2797 = vand.u32 %v55, 4294901760
    %v2798 = vsub.f32 %v55, %v2797
    %v2799 = vand.u32 %v2798, 4294901760
    %2800 = vmatpush.msra.mxu0 %v2799
    %v2801 = vand.u32 %v54, 4294901760
    %v2802 = vsub.f32 %v54, %v2801
    %v2803 = vand.u32 %v2802, 4294901760
    %2804 = vmatpush.msra.mxu0 %v2803
    %v2805 = vand.u32 %v53, 4294901760
    %v2806 = vsub.f32 %v53, %v2805
    %v2807 = vand.u32 %v2806, 4294901760
    %2808 = vmatpush.msra.mxu0 %v2807
    %v2809 = vand.u32 %v52, 4294901760
    %v2810 = vsub.f32 %v52, %v2809
    %v2811 = vand.u32 %v2810, 4294901760
    %2812 = vmatpush.msra.mxu0 %v2811
    %v2813 = vand.u32 %v51, 4294901760
    %v2814 = vsub.f32 %v51, %v2813
    %v2815 = vand.u32 %v2814, 4294901760
    %2816 = vmatpush.msra.mxu0 %v2815
    %v2817 = vand.u32 %v50, 4294901760
    %v2818 = vsub.f32 %v50, %v2817
    %v2819 = vand.u32 %v2818, 4294901760
    %2820 = vmatpush.msra.mxu0 %v2819
    %v2821 = vand.u32 %v49, 4294901760
    %v2822 = vsub.f32 %v49, %v2821
    %v2823 = vand.u32 %v2822, 4294901760
    %2824 = vmatpush.msra.mxu0 %v2823
    %v2825 = vand.u32 %v48, 4294901760
    %v2826 = vsub.f32 %v48, %v2825
    %v2827 = vand.u32 %v2826, 4294901760
    %2828 = vmatpush.msra.mxu0 %v2827
    %v2829 = vand.u32 %v2524, 4294901760
    %2830 = vmatmul.f32.gmra.mxu0 %v2829
    %v2831 = vpop.f32.mrf.mxu0
    %v2832 = vadd.f32 %v2763, %v2831
    %2833 = vdwg.mxu0
    %v2834 = vand.u32 %v63, 4294901760
    %2835 = vmatpush.msra.mxu0 %v2834
    %v2836 = vand.u32 %v62, 4294901760
    %2837 = vmatpush.msra.mxu0 %v2836
    %v2838 = vand.u32 %v61, 4294901760
    %2839 = vmatpush.msra.mxu0 %v2838
    %v2840 = vand.u32 %v60, 4294901760
    %2841 = vmatpush.msra.mxu0 %v2840
    %v2842 = vand.u32 %v59, 4294901760
    %2843 = vmatpush.msra.mxu0 %v2842
    %v2844 = vand.u32 %v58, 4294901760
    %2845 = vmatpush.msra.mxu0 %v2844
    %v2846 = vand.u32 %v57, 4294901760
    %2847 = vmatpush.msra.mxu0 %v2846
    %v2848 = vand.u32 %v56, 4294901760
    %2849 = vmatpush.msra.mxu0 %v2848
    %v2850 = vand.u32 %v55, 4294901760
    %2851 = vmatpush.msra.mxu0 %v2850
    %v2852 = vand.u32 %v54, 4294901760
    %2853 = vmatpush.msra.mxu0 %v2852
    %v2854 = vand.u32 %v53, 4294901760
    %2855 = vmatpush.msra.mxu0 %v2854
    %v2856 = vand.u32 %v52, 4294901760
    %2857 = vmatpush.msra.mxu0 %v2856
    %v2858 = vand.u32 %v51, 4294901760
    %2859 = vmatpush.msra.mxu0 %v2858
    %v2860 = vand.u32 %v50, 4294901760
    %2861 = vmatpush.msra.mxu0 %v2860
    %v2862 = vand.u32 %v49, 4294901760
    %2863 = vmatpush.msra.mxu0 %v2862
    %v2864 = vand.u32 %v48, 4294901760
    %2865 = vmatpush.msra.mxu0 %v2864
    %v2866 = vand.u32 %v2524, 4294901760
    %2867 = vmatmul.f32.gmra.mxu0 %v2866
    %v2868 = vpop.f32.mrf.mxu0
    %v2869 = vadd.f32 %v2832, %v2868
    %2870 = vdwg.mxu0
    %v2871 = vtanh.pop %v2869
    %v2872 = vmul.f32 %v2871, 0.001
    %v2873 = vadd.f32 %v2521, %v2872
    %v2874 = vmul.f32 %v2873, 0.5
    %v2875 = vadd.f32 %v2874, 1.0
    %v2876 = vmul.f32 %v2875, %v2871
    %s2877 = scalar_lea.vmem [#allocation9], %s2527
    %2878 = vst [vmem:[%s2877] sm:$0x1] %v2876
    %2879 = vst [vmem:[#allocation2] sm:$0x1] %v2876
    %2880 = vst [vmem:[#allocation3] sm:$0x1] %v2873
    // Predicated region
    $region22: #{tpu_custom_call.1} parent=1 // pred_check
      _
    $region23: #{tpu_custom_call.1} parent=1 // pred_check_branch
      %2882 = sbr.rel (0) target = $region25
    $region24: #{tpu_custom_call.1} parent=1 // pred_region
      %2884 = vsyncadd [#allocation6], 0
      %s2886 = sshll.u32 [#allocation9], 4
      %s2887 = int_to_ptr.vmem [resolvable:$true] %s2886
      %s2888 = sshll.u32 %s2, 4
      %s2889 = int_to_ptr.hbm [resolvable:$true] %s2888
      %2891 = dma.vmem_to_hbm [thread:$0]  %s2887, 128, %s2889, [#allocation6]
    $region25: #{tpu_custom_call.1} parent=1 // pred_fallthru
      _
    // Predicated region
    $region26: #{tpu_custom_call.1} parent=1 // pred_check
      _
    $region27: #{tpu_custom_call.1} parent=1 // pred_check_branch
      %2893 = sbr.rel (0) target = $region29
    $region28: #{tpu_custom_call.1} parent=1 // pred_region
      %2895 = dma.done [#allocation6], 128
    $region29: #{tpu_custom_call.1} parent=1 // pred_fallthru
      _
    %2896 = vsyncpa [#allocation5], 1
    %2897 = vsyncpa [#allocation8], 1
    %2898 = vsyncpa [#allocation6], 1

</llo_original>
